<compile_context>
chip_gen: v5e
topology: v5e:2x2
jax: 0.10.0
libtpu: 0.0.40
codegen_flags: <defaults>
</compile_context>

<pallas_src>
import jax
import jax.numpy as jnp
from jax.experimental import pallas as pl
from jax.experimental.pallas import tpu as pltpu

_NEG_BIG = -1e30  # bias fill for padded action columns -> exp() underflows to 0


def _round_up(x, m):
    return ((x + m - 1) // m) * m


def _cdiv(a, b):
    return (a + b - 1) // b


def _device_tiling():
    """(tb_max, force_two_steps) based on the TPU generation."""
    try:
        kind = jax.devices()[0].device_kind.lower()
    except Exception:  # pragma: no cover - defensive
        kind = ""
    if ("v6" in kind) or ("v7" in kind):
        tb_max = 1024
    else:
        tb_max = 512                      # v5e (16 MiB default scoped VMEM) & older
    force_two_steps = "v7" in kind        # v7x: 2 TensorCores per chip
    return tb_max, force_two_steps


def policy_net_kernel(x_ref,
                      w1_ref, b1_ref,
                      w2_ref, b2_ref,
                      w3_ref, b3_ref,
                      w4_ref, b4_ref,
                      o_ref):
    # fc1 + ReLU  (bf16 MXU operands, f32 accumulate / elementwise)
    h1 = jnp.dot(x_ref[...], w1_ref[...],
                 preferred_element_type=jnp.float32) + b1_ref[...]
    h1 = jnp.maximum(h1, 0.0)

    # fc2 + ReLU
    h2 = jnp.dot(h1.astype(jnp.bfloat16), w2_ref[...],
                 preferred_element_type=jnp.float32) + b2_ref[...]
    h2 = jnp.maximum(h2, 0.0)

    # fc3 + ReLU
    h3 = jnp.dot(h2.astype(jnp.bfloat16), w3_ref[...],
                 preferred_element_type=jnp.float32) + b3_ref[...]
    h3 = jnp.maximum(h3, 0.0)

    # fc4 + softmax over the (lane-dense, padded) action axis.
    # Padded columns carry a -1e30 f32 bias -> contribute exactly 0 after exp.
    logits = jnp.dot(h3.astype(jnp.bfloat16), w4_ref[...],
                     preferred_element_type=jnp.float32) + b4_ref[...]
    m = jnp.max(logits, axis=1, keepdims=True)
    e = jnp.exp(logits - m)
    denom = jnp.sum(e, axis=1, keepdims=True)
    o_ref[...] = e / denom               # exact divide: denom is (tb, 1), cost ~0


def _pick_batch_tile(B, tb_max, force_two_steps):
    """Even split of B into >= 1 (>= 2 on v7x when B > 128) tiles, mult. of 8."""
    steps = max(_cdiv(B, tb_max), 1)
    if force_two_steps and steps < 2 and B > 128:
        steps = 2                         # use both v7x TensorCores
    tb = _round_up(_cdiv(B, steps), 8)
    b_pad = tb * steps
    return tb, b_pad


def _vmem_limit_bytes(tb, s_pad, a_pad):
    f32, bf16 = 4, 2
    weights = (s_pad * 1024 + 1024 * 512 + 512 * 128 + 128 * a_pad) * bf16  # 1-buffered
    biases = (1024 + 512 + 128 + a_pad) * f32
    x_tile = 2 * tb * s_pad * bf16        # double-buffered input tile
    o_tile = 2 * tb * a_pad * f32         # double-buffered output tile
    acts = tb * (1024 + 512 + 128 + a_pad) * f32 + tb * (1024 + 512 + 128) * bf16
    est = weights + biases + x_tile + o_tile + acts
    return min(max(int(1.5 * est) + (4 << 20), 32 << 20), 48 << 20)


def policy_net_forward(x, params):
    """x: [B, state_dim] float32. params: dict of w1..w4 ([in,out]) / b1..b4 ([1,out])."""
    B, state_dim = x.shape
    action_dim = params["w4"].shape[1]
    h1d, h2d, h3d = 1024, 512, 128

    # --- padding / tiling choices -------------------------------------------
    tb_max, force_two_steps = _device_tiling()
    a_pad = _round_up(action_dim, 128)            # lane-dense output
    s_pad = _round_up(state_dim, 128)             # lane-dense input / clean MXU K
    tb, b_pad = _pick_batch_tile(B, tb_max, force_two_steps)

    x_p = jnp.pad(x, ((0, b_pad - B), (0, s_pad - state_dim))).astype(jnp.bfloat16)

    # bf16 weights (halve HBM traffic, MXU-native); biases stay f32.
    w1 = jnp.pad(params["w1"], ((0, s_pad - state_dim), (0, 0))).astype(jnp.bfloat16)
    w2 = params["w2"].astype(jnp.bfloat16)
    w3 = params["w3"].astype(jnp.bfloat16)
    w4 = jnp.pad(params["w4"],
                 ((0, 0), (0, a_pad - action_dim))).astype(jnp.bfloat16)
    b1, b2, b3 = params["b1"], params["b2"], params["b3"]
    b4 = jnp.pad(params["b4"], ((0, 0), (0, a_pad - action_dim)),
                 constant_values=_NEG_BIG)        # stays f32 (pad trick relies on it)

    def resident(arr):
        # Whole array, VMEM-resident across the batch grid; constant index_map
        # means it is DMA'd exactly once -> single-buffer it to reclaim VMEM.
        return pl.BlockSpec(arr.shape, lambda i: (0, 0),
                            pipeline_mode=pl.Buffered(1))

    cost = pl.CostEstimate(
        flops=2 * B * (state_dim * h1d + h1d * h2d + h2d * h3d
                       + h3d * action_dim),
        transcendentals=B * a_pad,
        bytes_accessed=int((w1.size + w2.size + w3.size + w4.size) * 2
                           + (b1.size + b2.size + b3.size + b4.size) * 4
                           + x_p.size * 2 + b_pad * a_pad * 4),
    )

    out = pl.pallas_call(
        policy_net_kernel,
        out_shape=jax.ShapeDtypeStruct((b_pad, a_pad), jnp.float32),
        grid=(b_pad // tb,),
        in_specs=[
            pl.BlockSpec((tb, s_pad), lambda i: (i, 0)),       # x tile (bf16, lane-dense)
            resident(w1), resident(b1),
            resident(w2), resident(b2),
            resident(w3), resident(b3),
            resident(w4), resident(b4),
        ],
        out_specs=pl.BlockSpec((tb, a_pad), lambda i: (i, 0)),
        compiler_params=pltpu.CompilerParams(
            dimension_semantics=("parallel",),
            vmem_limit_bytes=_vmem_limit_bytes(tb, s_pad, a_pad)),
        cost_estimate=cost,
    )(x_p, w1, b1, w2, b2, w3, b3, w4, b4)

    return out[:B, :action_dim]


def init_params(key, state_dim, action_dim):
    """Deterministic synthetic init (PyTorch-style uniform(-1/sqrt(in), 1/sqrt(in)))."""
    dims = [(state_dim, 1024), (1024, 512), (512, 128), (128, action_dim)]
    params = {}
    for idx, (din, dout) in enumerate(dims, start=1):
        key, kw, kb = jax.random.split(key, 3)
        bound = 1.0 / jnp.sqrt(float(din))
        params[f"w{idx}"] = jax.random.uniform(
            kw, (din, dout), jnp.float32, minval=-bound, maxval=bound)
        params[f"b{idx}"] = jax.random.uniform(
            kb, (1, dout), jnp.float32, minval=-bound, maxval=bound)
    return params


def _reference_forward(x, params):
    h = jnp.maximum(x @ params["w1"] + params["b1"], 0.0)
    h = jnp.maximum(h @ params["w2"] + params["b2"], 0.0)
    h = jnp.maximum(h @ params["w3"] + params["b3"], 0.0)
    logits = h @ params["w4"] + params["b4"]
    return jax.nn.softmax(logits, axis=1)


if __name__ == "__main__":
    B = 2
    state_dim = 32
    action_dim = 8

    key = jax.random.PRNGKey(0)
    key, kx = jax.random.split(key)
    x = jax.random.normal(kx, (B, state_dim), jnp.float32)
    params = init_params(key, state_dim, action_dim)

    probs = policy_net_forward(x, params)
    probs = jax.block_until_ready(probs)

    # sanity: rows are probability distributions, close to the f32 reference
    assert probs.shape == (B, action_dim)
    assert bool(jnp.all(jnp.isfinite(probs)))
    assert bool(jnp.all(probs >= 0.0))
    assert bool(jnp.allclose(jnp.sum(probs, axis=1), 1.0, atol=1e-5))
    ref = _reference_forward(x, params)
    assert bool(jnp.allclose(probs, ref, atol=3e-2)), "mismatch vs f32 reference"

    print("KERNEL_OK")
</pallas_src>

<mosaic_0001>
module attributes {stable_mosaic.version = 11 : i64} {
  func.func @policy_net_kernel(%arg0: i32, %arg1: memref<8x128xbf16, #tpu.memory_space<vmem>>, %arg2: memref<128x1024xbf16, #tpu.memory_space<vmem>>, %arg3: memref<1x1024xf32, #tpu.memory_space<vmem>>, %arg4: memref<1024x512xbf16, #tpu.memory_space<vmem>>, %arg5: memref<1x512xf32, #tpu.memory_space<vmem>>, %arg6: memref<512x128xbf16, #tpu.memory_space<vmem>>, %arg7: memref<1x128xf32, #tpu.memory_space<vmem>>, %arg8: memref<128x128xbf16, #tpu.memory_space<vmem>>, %arg9: memref<1x128xf32, #tpu.memory_space<vmem>>, %arg10: memref<8x128xf32, #tpu.memory_space<vmem>>) attributes {dimension_semantics = [#tpu.dimension_semantics<parallel>], iteration_bounds = array<i64: 1>, scalar_prefetch = 0 : i64, scratch_operands = 0 : i64, tpu.core_type = #tpu.core_type<tc>, window_params = [{transform_indices = @transform_0, window_bounds = array<i64: 8, 128>}, {pipeline_mode = #tpu.pipeline_mode<synchronous>, transform_indices = @transform_1, window_bounds = array<i64: 128, 1024>}, {pipeline_mode = #tpu.pipeline_mode<synchronous>, transform_indices = @transform_2, window_bounds = array<i64: 1, 1024>}, {pipeline_mode = #tpu.pipeline_mode<synchronous>, transform_indices = @transform_3, window_bounds = array<i64: 1024, 512>}, {pipeline_mode = #tpu.pipeline_mode<synchronous>, transform_indices = @transform_4, window_bounds = array<i64: 1, 512>}, {pipeline_mode = #tpu.pipeline_mode<synchronous>, transform_indices = @transform_5, window_bounds = array<i64: 512, 128>}, {pipeline_mode = #tpu.pipeline_mode<synchronous>, transform_indices = @transform_6, window_bounds = array<i64: 1, 128>}, {pipeline_mode = #tpu.pipeline_mode<synchronous>, transform_indices = @transform_7, window_bounds = array<i64: 128, 128>}, {pipeline_mode = #tpu.pipeline_mode<synchronous>, transform_indices = @transform_8, window_bounds = array<i64: 1, 128>}, {transform_indices = @transform_9, window_bounds = array<i64: 8, 128>}]} {
    %c0 = arith.constant 0 : index
    %c0_0 = arith.constant 0 : index
    %0 = vector.load %arg1[%c0, %c0_0] : memref<8x128xbf16, #tpu.memory_space<vmem>>, vector<8x128xbf16>
    %c0_1 = arith.constant 0 : index
    %c0_2 = arith.constant 0 : index
    %1 = vector.load %arg2[%c0_1, %c0_2] : memref<128x1024xbf16, #tpu.memory_space<vmem>>, vector<128x1024xbf16>
    %cst = arith.constant dense<0.000000e+00> : vector<8x1024xf32>
    %2 = tpu.matmul %0, %1, %cst {dimension_numbers = #tpu.dot_dimension_numbers<[1], [0], [0], [1], [0, 0, 1, 1], [], []>} : vector<8x128xbf16>, vector<128x1024xbf16>, vector<8x1024xf32> -> vector<8x1024xf32>
    %c0_3 = arith.constant 0 : index
    %c0_4 = arith.constant 0 : index
    %3 = vector.load %arg3[%c0_3, %c0_4] : memref<1x1024xf32, #tpu.memory_space<vmem>>, vector<1x1024xf32>
    %4 = vector.broadcast %3 : vector<1x1024xf32> to vector<8x1024xf32>
    %5 = arith.addf %2, %4 : vector<8x1024xf32>
    %cst_5 = arith.constant 0.000000e+00 : f32
    %6 = vector.broadcast %cst_5 : f32 to vector<8x1024xf32>
    %7 = arith.maximumf %5, %6 : vector<8x1024xf32>
    %8 = arith.truncf %7 : vector<8x1024xf32> to vector<8x1024xbf16>
    %c0_6 = arith.constant 0 : index
    %c0_7 = arith.constant 0 : index
    %9 = vector.load %arg4[%c0_6, %c0_7] : memref<1024x512xbf16, #tpu.memory_space<vmem>>, vector<1024x512xbf16>
    %cst_8 = arith.constant dense<0.000000e+00> : vector<8x512xf32>
    %10 = tpu.matmul %8, %9, %cst_8 {dimension_numbers = #tpu.dot_dimension_numbers<[1], [0], [0], [1], [0, 0, 1, 1], [], []>} : vector<8x1024xbf16>, vector<1024x512xbf16>, vector<8x512xf32> -> vector<8x512xf32>
    %c0_9 = arith.constant 0 : index
    %c0_10 = arith.constant 0 : index
    %11 = vector.load %arg5[%c0_9, %c0_10] : memref<1x512xf32, #tpu.memory_space<vmem>>, vector<1x512xf32>
    %12 = vector.broadcast %11 : vector<1x512xf32> to vector<8x512xf32>
    %13 = arith.addf %10, %12 : vector<8x512xf32>
    %cst_11 = arith.constant 0.000000e+00 : f32
    %14 = vector.broadcast %cst_11 : f32 to vector<8x512xf32>
    %15 = arith.maximumf %13, %14 : vector<8x512xf32>
    %16 = arith.truncf %15 : vector<8x512xf32> to vector<8x512xbf16>
    %c0_12 = arith.constant 0 : index
    %c0_13 = arith.constant 0 : index
    %17 = vector.load %arg6[%c0_12, %c0_13] : memref<512x128xbf16, #tpu.memory_space<vmem>>, vector<512x128xbf16>
    %cst_14 = arith.constant dense<0.000000e+00> : vector<8x128xf32>
    %18 = tpu.matmul %16, %17, %cst_14 {dimension_numbers = #tpu.dot_dimension_numbers<[1], [0], [0], [1], [0, 0, 1, 1], [], []>} : vector<8x512xbf16>, vector<512x128xbf16>, vector<8x128xf32> -> vector<8x128xf32>
    %c0_15 = arith.constant 0 : index
    %c0_16 = arith.constant 0 : index
    %19 = vector.load %arg7[%c0_15, %c0_16] : memref<1x128xf32, #tpu.memory_space<vmem>>, vector<1x128xf32>
    %20 = vector.broadcast %19 : vector<1x128xf32> to vector<8x128xf32>
    %21 = arith.addf %18, %20 : vector<8x128xf32>
    %cst_17 = arith.constant 0.000000e+00 : f32
    %22 = vector.broadcast %cst_17 : f32 to vector<8x128xf32>
    %23 = arith.maximumf %21, %22 : vector<8x128xf32>
    %24 = arith.truncf %23 : vector<8x128xf32> to vector<8x128xbf16>
    %c0_18 = arith.constant 0 : index
    %c0_19 = arith.constant 0 : index
    %25 = vector.load %arg8[%c0_18, %c0_19] : memref<128x128xbf16, #tpu.memory_space<vmem>>, vector<128x128xbf16>
    %cst_20 = arith.constant dense<0.000000e+00> : vector<8x128xf32>
    %26 = tpu.matmul %24, %25, %cst_20 {dimension_numbers = #tpu.dot_dimension_numbers<[1], [0], [0], [1], [0, 0, 1, 1], [], []>} : vector<8x128xbf16>, vector<128x128xbf16>, vector<8x128xf32> -> vector<8x128xf32>
    %c0_21 = arith.constant 0 : index
    %c0_22 = arith.constant 0 : index
    %27 = vector.load %arg9[%c0_21, %c0_22] : memref<1x128xf32, #tpu.memory_space<vmem>>, vector<1x128xf32>
    %28 = vector.broadcast %27 : vector<1x128xf32> to vector<8x128xf32>
    %29 = arith.addf %26, %28 : vector<8x128xf32>
    %cst_23 = arith.constant dense<0xFF800000> : vector<8xf32>
    %30 = vector.multi_reduction <maximumf>, %29, %cst_23 [1] : vector<8x128xf32> to vector<8xf32>
    %31 = vector.shape_cast %30 : vector<8xf32> to vector<8x1xf32>
    %32 = vector.broadcast %31 : vector<8x1xf32> to vector<8x128xf32>
    %33 = arith.subf %29, %32 : vector<8x128xf32>
    %34 = math.exp %33 : vector<8x128xf32>
    %cst_24 = arith.constant dense<0.000000e+00> : vector<8xf32>
    %35 = vector.multi_reduction <add>, %34, %cst_24 [1] : vector<8x128xf32> to vector<8xf32>
    %36 = vector.shape_cast %35 : vector<8xf32> to vector<8x1xf32>
    %37 = vector.broadcast %36 : vector<8x1xf32> to vector<8x128xf32>
    %38 = arith.divf %34, %37 : vector<8x128xf32>
    %c0_25 = arith.constant 0 : index
    %c0_26 = arith.constant 0 : index
    %39 = vector.load %arg10[%c0_25, %c0_26] : memref<8x128xf32, #tpu.memory_space<vmem>>, vector<8x128xf32>
    tpu.vector_store %arg10[%c0_25, %c0_26], %38 {strides = array<i32>} : memref<8x128xf32, #tpu.memory_space<vmem>>, vector<8x128xf32>,
    return
  }
  func.func @transform_0(%arg0: i32) -> (i32, i32) {
    %c0_i32 = arith.constant 0 : i32
    %c0_i32_0 = arith.constant 0 : i32
    return %arg0, %c0_i32 : i32, i32
  }
  func.func @transform_1(%arg0: i32) -> (i32, i32) {
    %c0_i32 = arith.constant 0 : i32
    %c0_i32_0 = arith.constant 0 : i32
    %c0_i32_1 = arith.constant 0 : i32
    return %c0_i32, %c0_i32_0 : i32, i32
  }
  func.func @transform_2(%arg0: i32) -> (i32, i32) {
    %c0_i32 = arith.constant 0 : i32
    %c0_i32_0 = arith.constant 0 : i32
    %c0_i32_1 = arith.constant 0 : i32
    return %c0_i32, %c0_i32_0 : i32, i32
  }
  func.func @transform_3(%arg0: i32) -> (i32, i32) {
    %c0_i32 = arith.constant 0 : i32
    %c0_i32_0 = arith.constant 0 : i32
    %c0_i32_1 = arith.constant 0 : i32
    return %c0_i32, %c0_i32_0 : i32, i32
  }
  func.func @transform_4(%arg0: i32) -> (i32, i32) {
    %c0_i32 = arith.constant 0 : i32
    %c0_i32_0 = arith.constant 0 : i32
    %c0_i32_1 = arith.constant 0 : i32
    return %c0_i32, %c0_i32_0 : i32, i32
  }
  func.func @transform_5(%arg0: i32) -> (i32, i32) {
    %c0_i32 = arith.constant 0 : i32
    %c0_i32_0 = arith.constant 0 : i32
    %c0_i32_1 = arith.constant 0 : i32
    return %c0_i32, %c0_i32_0 : i32, i32
  }
  func.func @transform_6(%arg0: i32) -> (i32, i32) {
    %c0_i32 = arith.constant 0 : i32
    %c0_i32_0 = arith.constant 0 : i32
    %c0_i32_1 = arith.constant 0 : i32
    return %c0_i32, %c0_i32_0 : i32, i32
  }
  func.func @transform_7(%arg0: i32) -> (i32, i32) {
    %c0_i32 = arith.constant 0 : i32
    %c0_i32_0 = arith.constant 0 : i32
    %c0_i32_1 = arith.constant 0 : i32
    return %c0_i32, %c0_i32_0 : i32, i32
  }
  func.func @transform_8(%arg0: i32) -> (i32, i32) {
    %c0_i32 = arith.constant 0 : i32
    %c0_i32_0 = arith.constant 0 : i32
    %c0_i32_1 = arith.constant 0 : i32
    return %c0_i32, %c0_i32_0 : i32, i32
  }
  func.func @transform_9(%arg0: i32) -> (i32, i32) {
    %c0_i32 = arith.constant 0 : i32
    %c0_i32_0 = arith.constant 0 : i32
    return %arg0, %c0_i32 : i32, i32
  }
}

</mosaic_0001>

<llo_original>
// kernel: tpu_custom_call.1
$region0: #{tpu_custom_call.1}
  #allocation0 [shape = 'u32[]', space=smem, size = 0x4, offset = 0x4, fixed_abs, tag = 'smem constant byte address 0x4 - core index']
  #allocation1 [shape = 'u32[72,128]{1,0:T(1,128)}', space=vmem, size = 0x9000, scoped, tag = 'internal scratch']
  %s0 = inlined_call_operand.hbm [shape: bf16[8,128], index: 0, kind: input, shape index: {}]
  %s1 = inlined_call_operand.hbm [shape: bf16[128,1024], index: 1, kind: input, shape index: {}]
  %s2 = inlined_call_operand.hbm [shape: f32[1,1024], index: 2, kind: input, shape index: {}]
  %s3 = inlined_call_operand.hbm [shape: bf16[1024,512], index: 3, kind: input, shape index: {}]
  %s4 = inlined_call_operand.hbm [shape: f32[1,512], index: 4, kind: input, shape index: {}]
  %s5 = inlined_call_operand.hbm [shape: bf16[512,128], index: 5, kind: input, shape index: {}]
  %s6 = inlined_call_operand.vmem [shape: f32[1,128], index: 6, kind: input, shape index: {}]
  %s7 = inlined_call_operand.hbm [shape: bf16[128,128], index: 7, kind: input, shape index: {}]
  %s8 = inlined_call_operand.vmem [shape: f32[1,128], index: 8, kind: input, shape index: {}]
  %s9 = inlined_call_operand.hbm [shape: f32[8,128], index: 9, kind: output, shape index: {}]
  %s10 = sld [smem:[#allocation0]]
  $region74: #{tpu_custom_call.1} parent=0
    _
  %s12 = ssub.s32 1, %s10
  %s13 = scalar_select 0, %s12, %s10
  $region1: #{tpu_custom_call.1} parent=0
    #allocation2 [shape = 'u8[2048]{0}', space=vmem, size = 0x800, scoped, tag = 'input window, operand 0, single buffered']
    #allocation3 [shape = 's32[1]{0}', space=sflag, size = 0x4, scoped, tag = 'scoped memory for tpu_custom_call.1']
    #allocation4 [shape = 's32[1]{0}', space=sflag, size = 0x4, scoped, tag = 'scoped memory for tpu_custom_call.1']
    #allocation5 [shape = 'u8[262144]{0}', space=vmem, size = 0x40000, scoped, tag = 'input window, operand 1, single buffered']
    #allocation6 [shape = 's32[1]{0}', space=sflag, size = 0x4, scoped, tag = 'scoped memory for tpu_custom_call.1']
    #allocation7 [shape = 'u8[4096]{0}', space=vmem, size = 0x1000, scoped, tag = 'input window, operand 2, single buffered']
    #allocation8 [shape = 'u8[1048576]{0}', space=vmem, size = 0x100000, scoped, tag = 'input window, operand 3, single buffered']
    #allocation9 [shape = 's32[1]{0}', space=sflag, size = 0x4, scoped, tag = 'scoped memory for tpu_custom_call.1']
    #allocation10 [shape = 'u8[2048]{0}', space=vmem, size = 0x800, scoped, tag = 'input window, operand 4, single buffered']
    #allocation11 [shape = 'u8[131072]{0}', space=vmem, size = 0x20000, scoped, tag = 'input window, operand 5, single buffered']
    #allocation12 [shape = 's32[1]{0}', space=sflag, size = 0x4, scoped, tag = 'scoped memory for tpu_custom_call.1']
    #allocation13 [shape = 'u8[32768]{0}', space=vmem, size = 0x8000, scoped, tag = 'input window, operand 7, single buffered']
    #allocation14 [shape = 'u8[4096]{0}', space=vmem, size = 0x1000, scoped, tag = 'output window, operand 0, single buffered']
    %14 = vsyncpa [#allocation3], 0
    %15 = vsyncpa [#allocation6], 0
    %16 = vsyncpa [#allocation9], 0
    %17 = vsyncpa [#allocation12], 0
    %18 = vsyncpa [#allocation4], 0
    // Predicated region
    $region2: #{tpu_custom_call.1} parent=1 // pred_check
      _
    $region3: #{tpu_custom_call.1} parent=1 // pred_check_branch
      %20 = sbr.rel (0) target = $region5
    $region4: #{tpu_custom_call.1} parent=1 // pred_region
      %22 = vsyncadd [#allocation3], 0
      %s24 = sshll.u32 %s0, 4
      %s25 = int_to_ptr.hbm [resolvable:$true] %s24
      %s26 = sshll.u32 [#allocation2], 4
      %s27 = int_to_ptr.vmem [resolvable:$true] %s26
      %29 = dma.hbm_to_vmem [thread:$0]  %s25, 64, %s27, [#allocation3]
    $region5: #{tpu_custom_call.1} parent=1 // pred_fallthru
      _
    // Predicated region
    $region6: #{tpu_custom_call.1} parent=1 // pred_check
      _
    $region7: #{tpu_custom_call.1} parent=1 // pred_check_branch
      %31 = sbr.rel (0) target = $region9
    $region8: #{tpu_custom_call.1} parent=1 // pred_region
      %33 = vsyncadd [#allocation6], 0
      %s34 = sshll.u32 %s1, 4
      %s35 = int_to_ptr.hbm [resolvable:$true] %s34
      %s36 = sshll.u32 [#allocation5], 4
      %s37 = int_to_ptr.vmem [resolvable:$true] %s36
      %42 = dma.hbm_to_vmem [thread:$0]  %s35, 8192, %s37, [#allocation6], 512, 512, 32
    $region9: #{tpu_custom_call.1} parent=1 // pred_fallthru
      _
    // Predicated region
    $region10: #{tpu_custom_call.1} parent=1 // pred_check
      _
    $region11: #{tpu_custom_call.1} parent=1 // pred_check_branch
      %44 = sbr.rel (0) target = $region13
    $region12: #{tpu_custom_call.1} parent=1 // pred_region
      %46 = vsyncadd [#allocation6], 0
      %s48 = sshll.u32 %s2, 4
      %s49 = int_to_ptr.hbm [resolvable:$true] %s48
      %s50 = sshll.u32 [#allocation7], 4
      %s51 = int_to_ptr.vmem [resolvable:$true] %s50
      %53 = dma.hbm_to_vmem [thread:$0]  %s49, 128, %s51, [#allocation6]
    $region13: #{tpu_custom_call.1} parent=1 // pred_fallthru
      _
    // Predicated region
    $region14: #{tpu_custom_call.1} parent=1 // pred_check
      _
    $region15: #{tpu_custom_call.1} parent=1 // pred_check_branch
      %55 = sbr.rel (0) target = $region17
    $region16: #{tpu_custom_call.1} parent=1 // pred_region
      %57 = vsyncadd [#allocation9], 0
      %s58 = sshll.u32 %s3, 4
      %s59 = int_to_ptr.hbm [resolvable:$true] %s58
      %s60 = sshll.u32 [#allocation8], 4
      %s61 = int_to_ptr.vmem [resolvable:$true] %s60
      %66 = dma.hbm_to_vmem [thread:$0]  %s59, 32768, %s61, [#allocation9], 256, 256, 16
    $region17: #{tpu_custom_call.1} parent=1 // pred_fallthru
      _
    // Predicated region
    $region18: #{tpu_custom_call.1} parent=1 // pred_check
      _
    $region19: #{tpu_custom_call.1} parent=1 // pred_check_branch
      %68 = sbr.rel (0) target = $region21
    $region20: #{tpu_custom_call.1} parent=1 // pred_region
      %70 = vsyncadd [#allocation9], 0
      %s72 = sshll.u32 %s4, 4
      %s73 = int_to_ptr.hbm [resolvable:$true] %s72
      %s74 = sshll.u32 [#allocation10], 4
      %s75 = int_to_ptr.vmem [resolvable:$true] %s74
      %77 = dma.hbm_to_vmem [thread:$0]  %s73, 64, %s75, [#allocation9]
    $region21: #{tpu_custom_call.1} parent=1 // pred_fallthru
      _
    // Predicated region
    $region22: #{tpu_custom_call.1} parent=1 // pred_check
      _
    $region23: #{tpu_custom_call.1} parent=1 // pred_check_branch
      %79 = sbr.rel (0) target = $region25
    $region24: #{tpu_custom_call.1} parent=1 // pred_region
      %81 = vsyncadd [#allocation12], 0
      %s82 = sshll.u32 %s5, 4
      %s83 = int_to_ptr.hbm [resolvable:$true] %s82
      %s84 = sshll.u32 [#allocation11], 4
      %s85 = int_to_ptr.vmem [resolvable:$true] %s84
      %90 = dma.hbm_to_vmem [thread:$0]  %s83, 4096, %s85, [#allocation12], 64, 64, 4
    $region25: #{tpu_custom_call.1} parent=1 // pred_fallthru
      _
    // Predicated region
    $region26: #{tpu_custom_call.1} parent=1 // pred_check
      _
    $region27: #{tpu_custom_call.1} parent=1 // pred_check_branch
      %92 = sbr.rel (0) target = $region29
    $region28: #{tpu_custom_call.1} parent=1 // pred_region
      _
    $region29: #{tpu_custom_call.1} parent=1 // pred_fallthru
      _
    // Predicated region
    $region30: #{tpu_custom_call.1} parent=1 // pred_check
      _
    $region31: #{tpu_custom_call.1} parent=1 // pred_check_branch
      %94 = sbr.rel (0) target = $region33
    $region32: #{tpu_custom_call.1} parent=1 // pred_region
      %96 = vsyncadd [#allocation12], 0
      %s97 = sshll.u32 %s7, 4
      %s98 = int_to_ptr.hbm [resolvable:$true] %s97
      %s99 = sshll.u32 [#allocation13], 4
      %s100 = int_to_ptr.vmem [resolvable:$true] %s99
      %105 = dma.hbm_to_vmem [thread:$0]  %s98, 1024, %s100, [#allocation12], 64, 64, 4
    $region33: #{tpu_custom_call.1} parent=1 // pred_fallthru
      _
    // Predicated region
    $region34: #{tpu_custom_call.1} parent=1 // pred_check
      _
    $region35: #{tpu_custom_call.1} parent=1 // pred_check_branch
      %107 = sbr.rel (0) target = $region37
    $region36: #{tpu_custom_call.1} parent=1 // pred_region
      _
    $region37: #{tpu_custom_call.1} parent=1 // pred_fallthru
      _
    // Predicated region
    $region38: #{tpu_custom_call.1} parent=1 // pred_check
      _
    $region39: #{tpu_custom_call.1} parent=1 // pred_check_branch
      %109 = sbr.rel (0) target = $region41
    $region40: #{tpu_custom_call.1} parent=1 // pred_region
      %111 = dma.done [#allocation3], 64
    $region41: #{tpu_custom_call.1} parent=1 // pred_fallthru
      _
    // Predicated region
    $region42: #{tpu_custom_call.1} parent=1 // pred_check
      _
    $region43: #{tpu_custom_call.1} parent=1 // pred_check_branch
      %113 = sbr.rel (0) target = $region45
    $region44: #{tpu_custom_call.1} parent=1 // pred_region
      %115 = dma.done [#allocation6], 8192
    $region45: #{tpu_custom_call.1} parent=1 // pred_fallthru
      _
    // Predicated region
    $region46: #{tpu_custom_call.1} parent=1 // pred_check
      _
    $region47: #{tpu_custom_call.1} parent=1 // pred_check_branch
      %117 = sbr.rel (0) target = $region49
    $region48: #{tpu_custom_call.1} parent=1 // pred_region
      %119 = dma.done [#allocation6], 128
    $region49: #{tpu_custom_call.1} parent=1 // pred_fallthru
      _
    // Predicated region
    $region50: #{tpu_custom_call.1} parent=1 // pred_check
      _
    $region51: #{tpu_custom_call.1} parent=1 // pred_check_branch
      %121 = sbr.rel (0) target = $region53
    $region52: #{tpu_custom_call.1} parent=1 // pred_region
      %123 = dma.done [#allocation9], 32768
    $region53: #{tpu_custom_call.1} parent=1 // pred_fallthru
      _
    // Predicated region
    $region54: #{tpu_custom_call.1} parent=1 // pred_check
      _
    $region55: #{tpu_custom_call.1} parent=1 // pred_check_branch
      %125 = sbr.rel (0) target = $region57
    $region56: #{tpu_custom_call.1} parent=1 // pred_region
      %127 = dma.done [#allocation9], 64
    $region57: #{tpu_custom_call.1} parent=1 // pred_fallthru
      _
    // Predicated region
    $region58: #{tpu_custom_call.1} parent=1 // pred_check
      _
    $region59: #{tpu_custom_call.1} parent=1 // pred_check_branch
      %129 = sbr.rel (0) target = $region61
    $region60: #{tpu_custom_call.1} parent=1 // pred_region
      %131 = dma.done [#allocation12], 4096
    $region61: #{tpu_custom_call.1} parent=1 // pred_fallthru
      _
    // Predicated region
    $region62: #{tpu_custom_call.1} parent=1 // pred_check
      _
    $region63: #{tpu_custom_call.1} parent=1 // pred_check_branch
      %133 = sbr.rel (0) target = $region65
    $region64: #{tpu_custom_call.1} parent=1 // pred_region
      %135 = dma.done [#allocation12], 1024
    $region65: #{tpu_custom_call.1} parent=1 // pred_fallthru
      _
    %v136 = vld [vmem:[#allocation2] sm:$0xf]
    %v137 = vld [vmem:[#allocation5] sm:$0xff]
    %v138 = vld [vmem:[#allocation5 + $0x8] sm:$0xff]
    %v139 = vld [vmem:[#allocation5 + $0x10] sm:$0xff]
    %v140 = vld [vmem:[#allocation5 + $0x18] sm:$0xff]
    %v141 = vld [vmem:[#allocation5 + $0x20] sm:$0xff]
    %v142 = vld [vmem:[#allocation5 + $0x28] sm:$0xff]
    %v143 = vld [vmem:[#allocation5 + $0x30] sm:$0xff]
    %v144 = vld [vmem:[#allocation5 + $0x38] sm:$0xff]
    %v145 = vld [vmem:[#allocation5 + $0x40] sm:$0xff]
    %v146 = vld [vmem:[#allocation5 + $0x48] sm:$0xff]
    %v147 = vld [vmem:[#allocation5 + $0x50] sm:$0xff]
    %v148 = vld [vmem:[#allocation5 + $0x58] sm:$0xff]
    %v149 = vld [vmem:[#allocation5 + $0x60] sm:$0xff]
    %v150 = vld [vmem:[#allocation5 + $0x68] sm:$0xff]
    %v151 = vld [vmem:[#allocation5 + $0x70] sm:$0xff]
    %v152 = vld [vmem:[#allocation5 + $0x78] sm:$0xff]
    %v153 = vld [vmem:[#allocation5 + $0x80] sm:$0xff]
    %v154 = vld [vmem:[#allocation5 + $0x88] sm:$0xff]
    %v155 = vld [vmem:[#allocation5 + $0x90] sm:$0xff]
    %v156 = vld [vmem:[#allocation5 + $0x98] sm:$0xff]
    %v157 = vld [vmem:[#allocation5 + $0xa0] sm:$0xff]
    %v158 = vld [vmem:[#allocation5 + $0xa8] sm:$0xff]
    %v159 = vld [vmem:[#allocation5 + $0xb0] sm:$0xff]
    %v160 = vld [vmem:[#allocation5 + $0xb8] sm:$0xff]
    %v161 = vld [vmem:[#allocation5 + $0xc0] sm:$0xff]
    %v162 = vld [vmem:[#allocation5 + $0xc8] sm:$0xff]
    %v163 = vld [vmem:[#allocation5 + $0xd0] sm:$0xff]
    %v164 = vld [vmem:[#allocation5 + $0xd8] sm:$0xff]
    %v165 = vld [vmem:[#allocation5 + $0xe0] sm:$0xff]
    %v166 = vld [vmem:[#allocation5 + $0xe8] sm:$0xff]
    %v167 = vld [vmem:[#allocation5 + $0xf0] sm:$0xff]
    %v168 = vld [vmem:[#allocation5 + $0xf8] sm:$0xff]
    %v169 = vld [vmem:[#allocation5 + $0x100] sm:$0xff]
    %v170 = vld [vmem:[#allocation5 + $0x108] sm:$0xff]
    %v171 = vld [vmem:[#allocation5 + $0x110] sm:$0xff]
    %v172 = vld [vmem:[#allocation5 + $0x118] sm:$0xff]
    %v173 = vld [vmem:[#allocation5 + $0x120] sm:$0xff]
    %v174 = vld [vmem:[#allocation5 + $0x128] sm:$0xff]
    %v175 = vld [vmem:[#allocation5 + $0x130] sm:$0xff]
    %v176 = vld [vmem:[#allocation5 + $0x138] sm:$0xff]
    %v177 = vld [vmem:[#allocation5 + $0x140] sm:$0xff]
    %v178 = vld [vmem:[#allocation5 + $0x148] sm:$0xff]
    %v179 = vld [vmem:[#allocation5 + $0x150] sm:$0xff]
    %v180 = vld [vmem:[#allocation5 + $0x158] sm:$0xff]
    %v181 = vld [vmem:[#allocation5 + $0x160] sm:$0xff]
    %v182 = vld [vmem:[#allocation5 + $0x168] sm:$0xff]
    %v183 = vld [vmem:[#allocation5 + $0x170] sm:$0xff]
    %v184 = vld [vmem:[#allocation5 + $0x178] sm:$0xff]
    %v185 = vld [vmem:[#allocation5 + $0x180] sm:$0xff]
    %v186 = vld [vmem:[#allocation5 + $0x188] sm:$0xff]
    %v187 = vld [vmem:[#allocation5 + $0x190] sm:$0xff]
    %v188 = vld [vmem:[#allocation5 + $0x198] sm:$0xff]
    %v189 = vld [vmem:[#allocation5 + $0x1a0] sm:$0xff]
    %v190 = vld [vmem:[#allocation5 + $0x1a8] sm:$0xff]
    %v191 = vld [vmem:[#allocation5 + $0x1b0] sm:$0xff]
    %v192 = vld [vmem:[#allocation5 + $0x1b8] sm:$0xff]
    %v193 = vld [vmem:[#allocation5 + $0x1c0] sm:$0xff]
    %v194 = vld [vmem:[#allocation5 + $0x1c8] sm:$0xff]
    %v195 = vld [vmem:[#allocation5 + $0x1d0] sm:$0xff]
    %v196 = vld [vmem:[#allocation5 + $0x1d8] sm:$0xff]
    %v197 = vld [vmem:[#allocation5 + $0x1e0] sm:$0xff]
    %v198 = vld [vmem:[#allocation5 + $0x1e8] sm:$0xff]
    %v199 = vld [vmem:[#allocation5 + $0x1f0] sm:$0xff]
    %v200 = vld [vmem:[#allocation5 + $0x1f8] sm:$0xff]
    %v201 = vld [vmem:[#allocation7] sm:$0xff]
    %v203 = vperm.slane %v201, 0
    %v204 = vperm.slane %v201, 1
    %v205 = vperm.slane %v201, 2
    %v206 = vperm.slane %v201, 3
    %v207 = vperm.slane %v201, 4
    %v208 = vperm.slane %v201, 5
    %v209 = vperm.slane %v201, 6
    %v210 = vperm.slane %v201, 7
    %v283 = vunpack.c.l.b16 %v137
    %v284 = vunpack.c.h.b16 %v137
    %v285 = vunpack.c.l.b16 %v138
    %v286 = vunpack.c.h.b16 %v138
    %v287 = vunpack.c.l.b16 %v139
    %v288 = vunpack.c.h.b16 %v139
    %v289 = vunpack.c.l.b16 %v140
    %v290 = vunpack.c.h.b16 %v140
    %v291 = vunpack.c.l.b16 %v141
    %v292 = vunpack.c.h.b16 %v141
    %v293 = vunpack.c.l.b16 %v142
    %v294 = vunpack.c.h.b16 %v142
    %v295 = vunpack.c.l.b16 %v143
    %v296 = vunpack.c.h.b16 %v143
    %v297 = vunpack.c.l.b16 %v144
    %v298 = vunpack.c.h.b16 %v144
    %v299 = vunpack.c.l.b16 %v145
    %v300 = vunpack.c.h.b16 %v145
    %v301 = vunpack.c.l.b16 %v146
    %v302 = vunpack.c.h.b16 %v146
    %v303 = vunpack.c.l.b16 %v147
    %v304 = vunpack.c.h.b16 %v147
    %v305 = vunpack.c.l.b16 %v148
    %v306 = vunpack.c.h.b16 %v148
    %v307 = vunpack.c.l.b16 %v149
    %v308 = vunpack.c.h.b16 %v149
    %v309 = vunpack.c.l.b16 %v150
    %v310 = vunpack.c.h.b16 %v150
    %v311 = vunpack.c.l.b16 %v151
    %v312 = vunpack.c.h.b16 %v151
    %v313 = vunpack.c.l.b16 %v152
    %v314 = vunpack.c.h.b16 %v152
    %v315 = vunpack.c.l.b16 %v153
    %v316 = vunpack.c.h.b16 %v153
    %v317 = vunpack.c.l.b16 %v154
    %v318 = vunpack.c.h.b16 %v154
    %v319 = vunpack.c.l.b16 %v155
    %v320 = vunpack.c.h.b16 %v155
    %v321 = vunpack.c.l.b16 %v156
    %v322 = vunpack.c.h.b16 %v156
    %v323 = vunpack.c.l.b16 %v157
    %v324 = vunpack.c.h.b16 %v157
    %v325 = vunpack.c.l.b16 %v158
    %v326 = vunpack.c.h.b16 %v158
    %v327 = vunpack.c.l.b16 %v159
    %v328 = vunpack.c.h.b16 %v159
    %v329 = vunpack.c.l.b16 %v160
    %v330 = vunpack.c.h.b16 %v160
    %v331 = vunpack.c.l.b16 %v161
    %v332 = vunpack.c.h.b16 %v161
    %v333 = vunpack.c.l.b16 %v162
    %v334 = vunpack.c.h.b16 %v162
    %v335 = vunpack.c.l.b16 %v163
    %v336 = vunpack.c.h.b16 %v163
    %v337 = vunpack.c.l.b16 %v164
    %v338 = vunpack.c.h.b16 %v164
    %v339 = vunpack.c.l.b16 %v165
    %v340 = vunpack.c.h.b16 %v165
    %v341 = vunpack.c.l.b16 %v166
    %v342 = vunpack.c.h.b16 %v166
    %v343 = vunpack.c.l.b16 %v167
    %v344 = vunpack.c.h.b16 %v167
    %v345 = vunpack.c.l.b16 %v168
    %v346 = vunpack.c.h.b16 %v168
    %v347 = vunpack.c.l.b16 %v169
    %v348 = vunpack.c.h.b16 %v169
    %v349 = vunpack.c.l.b16 %v170
    %v350 = vunpack.c.h.b16 %v170
    %v351 = vunpack.c.l.b16 %v171
    %v352 = vunpack.c.h.b16 %v171
    %v353 = vunpack.c.l.b16 %v172
    %v354 = vunpack.c.h.b16 %v172
    %v355 = vunpack.c.l.b16 %v173
    %v356 = vunpack.c.h.b16 %v173
    %v357 = vunpack.c.l.b16 %v174
    %v358 = vunpack.c.h.b16 %v174
    %v359 = vunpack.c.l.b16 %v175
    %v360 = vunpack.c.h.b16 %v175
    %v361 = vunpack.c.l.b16 %v176
    %v362 = vunpack.c.h.b16 %v176
    %v363 = vunpack.c.l.b16 %v177
    %v364 = vunpack.c.h.b16 %v177
    %v365 = vunpack.c.l.b16 %v178
    %v366 = vunpack.c.h.b16 %v178
    %v367 = vunpack.c.l.b16 %v179
    %v368 = vunpack.c.h.b16 %v179
    %v369 = vunpack.c.l.b16 %v180
    %v370 = vunpack.c.h.b16 %v180
    %v371 = vunpack.c.l.b16 %v181
    %v372 = vunpack.c.h.b16 %v181
    %v373 = vunpack.c.l.b16 %v182
    %v374 = vunpack.c.h.b16 %v182
    %v375 = vunpack.c.l.b16 %v183
    %v376 = vunpack.c.h.b16 %v183
    %v377 = vunpack.c.l.b16 %v184
    %v378 = vunpack.c.h.b16 %v184
    %v379 = vunpack.c.l.b16 %v185
    %v380 = vunpack.c.h.b16 %v185
    %v381 = vunpack.c.l.b16 %v186
    %v382 = vunpack.c.h.b16 %v186
    %v383 = vunpack.c.l.b16 %v187
    %v384 = vunpack.c.h.b16 %v187
    %v385 = vunpack.c.l.b16 %v188
    %v386 = vunpack.c.h.b16 %v188
    %v387 = vunpack.c.l.b16 %v189
    %v388 = vunpack.c.h.b16 %v189
    %v389 = vunpack.c.l.b16 %v190
    %v390 = vunpack.c.h.b16 %v190
    %v391 = vunpack.c.l.b16 %v191
    %v392 = vunpack.c.h.b16 %v191
    %v393 = vunpack.c.l.b16 %v192
    %v394 = vunpack.c.h.b16 %v192
    %v395 = vunpack.c.l.b16 %v193
    %v396 = vunpack.c.h.b16 %v193
    %v397 = vunpack.c.l.b16 %v194
    %v398 = vunpack.c.h.b16 %v194
    %v399 = vunpack.c.l.b16 %v195
    %v400 = vunpack.c.h.b16 %v195
    %v401 = vunpack.c.l.b16 %v196
    %v402 = vunpack.c.h.b16 %v196
    %v403 = vunpack.c.l.b16 %v197
    %v404 = vunpack.c.h.b16 %v197
    %v405 = vunpack.c.l.b16 %v198
    %v406 = vunpack.c.h.b16 %v198
    %v407 = vunpack.c.l.b16 %v199
    %v408 = vunpack.c.h.b16 %v199
    %v409 = vunpack.c.l.b16 %v200
    %v410 = vunpack.c.h.b16 %v200
    %v411 = vpack.c.b16 %v291, %v283
    %v412 = vpack.c.b16 %v292, %v284
    %v413 = vpack.c.b16 %v293, %v285
    %v414 = vpack.c.b16 %v294, %v286
    %v415 = vpack.c.b16 %v295, %v287
    %v416 = vpack.c.b16 %v296, %v288
    %v417 = vpack.c.b16 %v297, %v289
    %v418 = vpack.c.b16 %v298, %v290
    %v419 = vpack.c.b16 %v307, %v299
    %v420 = vpack.c.b16 %v308, %v300
    %v421 = vpack.c.b16 %v309, %v301
    %v422 = vpack.c.b16 %v310, %v302
    %v423 = vpack.c.b16 %v311, %v303
    %v424 = vpack.c.b16 %v312, %v304
    %v425 = vpack.c.b16 %v313, %v305
    %v426 = vpack.c.b16 %v314, %v306
    %v427 = vpack.c.b16 %v323, %v315
    %v428 = vpack.c.b16 %v324, %v316
    %v429 = vpack.c.b16 %v325, %v317
    %v430 = vpack.c.b16 %v326, %v318
    %v431 = vpack.c.b16 %v327, %v319
    %v432 = vpack.c.b16 %v328, %v320
    %v433 = vpack.c.b16 %v329, %v321
    %v434 = vpack.c.b16 %v330, %v322
    %v435 = vpack.c.b16 %v339, %v331
    %v436 = vpack.c.b16 %v340, %v332
    %v437 = vpack.c.b16 %v341, %v333
    %v438 = vpack.c.b16 %v342, %v334
    %v439 = vpack.c.b16 %v343, %v335
    %v440 = vpack.c.b16 %v344, %v336
    %v441 = vpack.c.b16 %v345, %v337
    %v442 = vpack.c.b16 %v346, %v338
    %v443 = vpack.c.b16 %v355, %v347
    %v444 = vpack.c.b16 %v356, %v348
    %v445 = vpack.c.b16 %v357, %v349
    %v446 = vpack.c.b16 %v358, %v350
    %v447 = vpack.c.b16 %v359, %v351
    %v448 = vpack.c.b16 %v360, %v352
    %v449 = vpack.c.b16 %v361, %v353
    %v450 = vpack.c.b16 %v362, %v354
    %v451 = vpack.c.b16 %v371, %v363
    %v452 = vpack.c.b16 %v372, %v364
    %v453 = vpack.c.b16 %v373, %v365
    %v454 = vpack.c.b16 %v374, %v366
    %v455 = vpack.c.b16 %v375, %v367
    %v456 = vpack.c.b16 %v376, %v368
    %v457 = vpack.c.b16 %v377, %v369
    %v458 = vpack.c.b16 %v378, %v370
    %v459 = vpack.c.b16 %v387, %v379
    %v460 = vpack.c.b16 %v388, %v380
    %v461 = vpack.c.b16 %v389, %v381
    %v462 = vpack.c.b16 %v390, %v382
    %v463 = vpack.c.b16 %v391, %v383
    %v464 = vpack.c.b16 %v392, %v384
    %v465 = vpack.c.b16 %v393, %v385
    %v466 = vpack.c.b16 %v394, %v386
    %v467 = vpack.c.b16 %v403, %v395
    %v468 = vpack.c.b16 %v404, %v396
    %v469 = vpack.c.b16 %v405, %v397
    %v470 = vpack.c.b16 %v406, %v398
    %v471 = vpack.c.b16 %v407, %v399
    %v472 = vpack.c.b16 %v408, %v400
    %v473 = vpack.c.b16 %v409, %v401
    %v474 = vpack.c.b16 %v410, %v402
    %539 = vmatpush.bf16.msra.mxu0 %v467
    %540 = vmatpush.bf16.msra.mxu0 %v459
    %541 = vmatpush.bf16.msra.mxu0 %v451
    %542 = vmatpush.bf16.msra.mxu0 %v443
    %543 = vmatpush.bf16.msra.mxu0 %v435
    %544 = vmatpush.bf16.msra.mxu0 %v427
    %545 = vmatpush.bf16.msra.mxu0 %v419
    %546 = vmatpush.bf16.msra.mxu0 %v411
    %547 = vmatmul.bf16.gmra.mxu0 %v136
    %v548 = vpop.f32.mrf.mxu0
    %v549 = vadd.f32 %v203, %v548
    %v550 = vpop.f32.mrf.mxu0
    %551 = vdwg.mxu0
    %552 = vmatpush.bf16.msra.mxu0 %v468
    %553 = vmatpush.bf16.msra.mxu0 %v460
    %554 = vmatpush.bf16.msra.mxu0 %v452
    %555 = vmatpush.bf16.msra.mxu0 %v444
    %556 = vmatpush.bf16.msra.mxu0 %v436
    %557 = vmatpush.bf16.msra.mxu0 %v428
    %558 = vmatpush.bf16.msra.mxu0 %v420
    %559 = vmatpush.bf16.msra.mxu0 %v412
    %560 = vmatmul.bf16.gmra.mxu0 %v136
    %v561 = vpop.f32.mrf.mxu0
    %v562 = vadd.f32 %v204, %v561
    %v563 = vpop.f32.mrf.mxu0
    %564 = vdwg.mxu0
    %565 = vmatpush.bf16.msra.mxu0 %v469
    %566 = vmatpush.bf16.msra.mxu0 %v461
    %567 = vmatpush.bf16.msra.mxu0 %v453
    %568 = vmatpush.bf16.msra.mxu0 %v445
    %569 = vmatpush.bf16.msra.mxu0 %v437
    %570 = vmatpush.bf16.msra.mxu0 %v429
    %571 = vmatpush.bf16.msra.mxu0 %v421
    %572 = vmatpush.bf16.msra.mxu0 %v413
    %573 = vmatmul.bf16.gmra.mxu0 %v136
    %v574 = vpop.f32.mrf.mxu0
    %v575 = vadd.f32 %v205, %v574
    %v576 = vpop.f32.mrf.mxu0
    %577 = vdwg.mxu0
    %578 = vmatpush.bf16.msra.mxu0 %v470
    %579 = vmatpush.bf16.msra.mxu0 %v462
    %580 = vmatpush.bf16.msra.mxu0 %v454
    %581 = vmatpush.bf16.msra.mxu0 %v446
    %582 = vmatpush.bf16.msra.mxu0 %v438
    %583 = vmatpush.bf16.msra.mxu0 %v430
    %584 = vmatpush.bf16.msra.mxu0 %v422
    %585 = vmatpush.bf16.msra.mxu0 %v414
    %586 = vmatmul.bf16.gmra.mxu0 %v136
    %v587 = vpop.f32.mrf.mxu0
    %v588 = vadd.f32 %v206, %v587
    %v589 = vpop.f32.mrf.mxu0
    %590 = vdwg.mxu0
    %591 = vmatpush.bf16.msra.mxu0 %v471
    %592 = vmatpush.bf16.msra.mxu0 %v463
    %593 = vmatpush.bf16.msra.mxu0 %v455
    %594 = vmatpush.bf16.msra.mxu0 %v447
    %595 = vmatpush.bf16.msra.mxu0 %v439
    %596 = vmatpush.bf16.msra.mxu0 %v431
    %597 = vmatpush.bf16.msra.mxu0 %v423
    %598 = vmatpush.bf16.msra.mxu0 %v415
    %599 = vmatmul.bf16.gmra.mxu0 %v136
    %v600 = vpop.f32.mrf.mxu0
    %v601 = vadd.f32 %v207, %v600
    %v602 = vpop.f32.mrf.mxu0
    %603 = vdwg.mxu0
    %604 = vmatpush.bf16.msra.mxu0 %v472
    %605 = vmatpush.bf16.msra.mxu0 %v464
    %606 = vmatpush.bf16.msra.mxu0 %v456
    %607 = vmatpush.bf16.msra.mxu0 %v448
    %608 = vmatpush.bf16.msra.mxu0 %v440
    %609 = vmatpush.bf16.msra.mxu0 %v432
    %610 = vmatpush.bf16.msra.mxu0 %v424
    %611 = vmatpush.bf16.msra.mxu0 %v416
    %612 = vmatmul.bf16.gmra.mxu0 %v136
    %v613 = vpop.f32.mrf.mxu0
    %v614 = vadd.f32 %v208, %v613
    %v615 = vpop.f32.mrf.mxu0
    %616 = vdwg.mxu0
    %617 = vmatpush.bf16.msra.mxu0 %v473
    %618 = vmatpush.bf16.msra.mxu0 %v465
    %619 = vmatpush.bf16.msra.mxu0 %v457
    %620 = vmatpush.bf16.msra.mxu0 %v449
    %621 = vmatpush.bf16.msra.mxu0 %v441
    %622 = vmatpush.bf16.msra.mxu0 %v433
    %623 = vmatpush.bf16.msra.mxu0 %v425
    %624 = vmatpush.bf16.msra.mxu0 %v417
    %625 = vmatmul.bf16.gmra.mxu0 %v136
    %v626 = vpop.f32.mrf.mxu0
    %v627 = vadd.f32 %v209, %v626
    %v628 = vpop.f32.mrf.mxu0
    %629 = vdwg.mxu0
    %630 = vmatpush.bf16.msra.mxu0 %v474
    %631 = vmatpush.bf16.msra.mxu0 %v466
    %632 = vmatpush.bf16.msra.mxu0 %v458
    %633 = vmatpush.bf16.msra.mxu0 %v450
    %634 = vmatpush.bf16.msra.mxu0 %v442
    %635 = vmatpush.bf16.msra.mxu0 %v434
    %636 = vmatpush.bf16.msra.mxu0 %v426
    %637 = vmatpush.bf16.msra.mxu0 %v418
    %638 = vmatmul.bf16.gmra.mxu0 %v136
    %v639 = vpop.f32.mrf.mxu0
    %v640 = vadd.f32 %v210, %v639
    %v641 = vpop.f32.mrf.mxu0
    %642 = vdwg.mxu0
    %v643 = vmax.f32 %v549, 0.0
    %v644 = vmax.f32 %v562, 0.0
    %v645 = vmax.f32 %v575, 0.0
    %v646 = vmax.f32 %v588, 0.0
    %v647 = vmax.f32 %v601, 0.0
    %v648 = vmax.f32 %v614, 0.0
    %v649 = vmax.f32 %v627, 0.0
    %v650 = vmax.f32 %v640, 0.0
    %v651 = vpack.c.bf16 %v643, %v643
    %v652 = vpack.c.bf16 %v644, %v644
    %v653 = vpack.c.bf16 %v645, %v645
    %v654 = vpack.c.bf16 %v646, %v646
    %v655 = vpack.c.bf16 %v647, %v647
    %v656 = vpack.c.bf16 %v648, %v648
    %v657 = vpack.c.bf16 %v649, %v649
    %v658 = vpack.c.bf16 %v650, %v650
    %v659 = vld [vmem:[#allocation8] sm:$0xff]
    %v660 = vld [vmem:[#allocation8 + $0x8] sm:$0xff]
    %v661 = vld [vmem:[#allocation8 + $0x10] sm:$0xff]
    %v662 = vld [vmem:[#allocation8 + $0x18] sm:$0xff]
    %v663 = vld [vmem:[#allocation8 + $0x20] sm:$0xff]
    %v664 = vld [vmem:[#allocation8 + $0x28] sm:$0xff]
    %v665 = vld [vmem:[#allocation8 + $0x30] sm:$0xff]
    %v666 = vld [vmem:[#allocation8 + $0x38] sm:$0xff]
    %v667 = vld [vmem:[#allocation8 + $0x40] sm:$0xff]
    %v668 = vld [vmem:[#allocation8 + $0x48] sm:$0xff]
    %v669 = vld [vmem:[#allocation8 + $0x50] sm:$0xff]
    %v670 = vld [vmem:[#allocation8 + $0x58] sm:$0xff]
    %v671 = vld [vmem:[#allocation8 + $0x60] sm:$0xff]
    %v672 = vld [vmem:[#allocation8 + $0x68] sm:$0xff]
    %v673 = vld [vmem:[#allocation8 + $0x70] sm:$0xff]
    %v674 = vld [vmem:[#allocation8 + $0x78] sm:$0xff]
    %v675 = vld [vmem:[#allocation8 + $0x80] sm:$0xff]
    %v676 = vld [vmem:[#allocation8 + $0x88] sm:$0xff]
    %v677 = vld [vmem:[#allocation8 + $0x90] sm:$0xff]
    %v678 = vld [vmem:[#allocation8 + $0x98] sm:$0xff]
    %v679 = vld [vmem:[#allocation8 + $0xa0] sm:$0xff]
    %v680 = vld [vmem:[#allocation8 + $0xa8] sm:$0xff]
    %v681 = vld [vmem:[#allocation8 + $0xb0] sm:$0xff]
    %v682 = vld [vmem:[#allocation8 + $0xb8] sm:$0xff]
    %v683 = vld [vmem:[#allocation8 + $0xc0] sm:$0xff]
    %v684 = vld [vmem:[#allocation8 + $0xc8] sm:$0xff]
    %v685 = vld [vmem:[#allocation8 + $0xd0] sm:$0xff]
    %v686 = vld [vmem:[#allocation8 + $0xd8] sm:$0xff]
    %v687 = vld [vmem:[#allocation8 + $0xe0] sm:$0xff]
    %v688 = vld [vmem:[#allocation8 + $0xe8] sm:$0xff]
    %v689 = vld [vmem:[#allocation8 + $0xf0] sm:$0xff]
    %v690 = vld [vmem:[#allocation8 + $0xf8] sm:$0xff]
    %v691 = vld [vmem:[#allocation8 + $0x100] sm:$0xff]
    %v692 = vld [vmem:[#allocation8 + $0x108] sm:$0xff]
    %v693 = vld [vmem:[#allocation8 + $0x110] sm:$0xff]
    %v694 = vld [vmem:[#allocation8 + $0x118] sm:$0xff]
    %v695 = vld [vmem:[#allocation8 + $0x120] sm:$0xff]
    %v696 = vld [vmem:[#allocation8 + $0x128] sm:$0xff]
    %v697 = vld [vmem:[#allocation8 + $0x130] sm:$0xff]
    %v698 = vld [vmem:[#allocation8 + $0x138] sm:$0xff]
    %v699 = vld [vmem:[#allocation8 + $0x140] sm:$0xff]
    %v700 = vld [vmem:[#allocation8 + $0x148] sm:$0xff]
    %v701 = vld [vmem:[#allocation8 + $0x150] sm:$0xff]
    %v702 = vld [vmem:[#allocation8 + $0x158] sm:$0xff]
    %v703 = vld [vmem:[#allocation8 + $0x160] sm:$0xff]
    %v704 = vld [vmem:[#allocation8 + $0x168] sm:$0xff]
    %v705 = vld [vmem:[#allocation8 + $0x170] sm:$0xff]
    %v706 = vld [vmem:[#allocation8 + $0x178] sm:$0xff]
    %v707 = vld [vmem:[#allocation8 + $0x180] sm:$0xff]
    %v708 = vld [vmem:[#allocation8 + $0x188] sm:$0xff]
    %v709 = vld [vmem:[#allocation8 + $0x190] sm:$0xff]
    %v710 = vld [vmem:[#allocation8 + $0x198] sm:$0xff]
    %v711 = vld [vmem:[#allocation8 + $0x1a0] sm:$0xff]
    %v712 = vld [vmem:[#allocation8 + $0x1a8] sm:$0xff]
    %v713 = vld [vmem:[#allocation8 + $0x1b0] sm:$0xff]
    %v714 = vld [vmem:[#allocation8 + $0x1b8] sm:$0xff]
    %v715 = vld [vmem:[#allocation8 + $0x1c0] sm:$0xff]
    %v716 = vld [vmem:[#allocation8 + $0x1c8] sm:$0xff]
    %v717 = vld [vmem:[#allocation8 + $0x1d0] sm:$0xff]
    %v718 = vld [vmem:[#allocation8 + $0x1d8] sm:$0xff]
    %v719 = vld [vmem:[#allocation8 + $0x1e0] sm:$0xff]
    %v720 = vld [vmem:[#allocation8 + $0x1e8] sm:$0xff]
    %v721 = vld [vmem:[#allocation8 + $0x1f0] sm:$0xff]
    %v722 = vld [vmem:[#allocation8 + $0x1f8] sm:$0xff]
    %v723 = vld [vmem:[#allocation8 + $0x200] sm:$0xff]
    %v724 = vld [vmem:[#allocation8 + $0x208] sm:$0xff]
    %v725 = vld [vmem:[#allocation8 + $0x210] sm:$0xff]
    %v726 = vld [vmem:[#allocation8 + $0x218] sm:$0xff]
    %v727 = vld [vmem:[#allocation8 + $0x220] sm:$0xff]
    %v728 = vld [vmem:[#allocation8 + $0x228] sm:$0xff]
    %v729 = vld [vmem:[#allocation8 + $0x230] sm:$0xff]
    %v730 = vld [vmem:[#allocation8 + $0x238] sm:$0xff]
    %v731 = vld [vmem:[#allocation8 + $0x240] sm:$0xff]
    %v732 = vld [vmem:[#allocation8 + $0x248] sm:$0xff]
    %v733 = vld [vmem:[#allocation8 + $0x250] sm:$0xff]
    %v734 = vld [vmem:[#allocation8 + $0x258] sm:$0xff]
    %v735 = vld [vmem:[#allocation8 + $0x260] sm:$0xff]
    %v736 = vld [vmem:[#allocation8 + $0x268] sm:$0xff]
    %v737 = vld [vmem:[#allocation8 + $0x270] sm:$0xff]
    %v738 = vld [vmem:[#allocation8 + $0x278] sm:$0xff]
    %v739 = vld [vmem:[#allocation8 + $0x280] sm:$0xff]
    %v740 = vld [vmem:[#allocation8 + $0x288] sm:$0xff]
    %v741 = vld [vmem:[#allocation8 + $0x290] sm:$0xff]
    %v742 = vld [vmem:[#allocation8 + $0x298] sm:$0xff]
    %v743 = vld [vmem:[#allocation8 + $0x2a0] sm:$0xff]
    %v744 = vld [vmem:[#allocation8 + $0x2a8] sm:$0xff]
    %v745 = vld [vmem:[#allocation8 + $0x2b0] sm:$0xff]
    %v746 = vld [vmem:[#allocation8 + $0x2b8] sm:$0xff]
    %v747 = vld [vmem:[#allocation8 + $0x2c0] sm:$0xff]
    %v748 = vld [vmem:[#allocation8 + $0x2c8] sm:$0xff]
    %v749 = vld [vmem:[#allocation8 + $0x2d0] sm:$0xff]
    %v750 = vld [vmem:[#allocation8 + $0x2d8] sm:$0xff]
    %v751 = vld [vmem:[#allocation8 + $0x2e0] sm:$0xff]
    %v752 = vld [vmem:[#allocation8 + $0x2e8] sm:$0xff]
    %v753 = vld [vmem:[#allocation8 + $0x2f0] sm:$0xff]
    %v754 = vld [vmem:[#allocation8 + $0x2f8] sm:$0xff]
    %v755 = vld [vmem:[#allocation8 + $0x300] sm:$0xff]
    %v756 = vld [vmem:[#allocation8 + $0x308] sm:$0xff]
    %v757 = vld [vmem:[#allocation8 + $0x310] sm:$0xff]
    %v758 = vld [vmem:[#allocation8 + $0x318] sm:$0xff]
    %v759 = vld [vmem:[#allocation8 + $0x320] sm:$0xff]
    %v760 = vld [vmem:[#allocation8 + $0x328] sm:$0xff]
    %v761 = vld [vmem:[#allocation8 + $0x330] sm:$0xff]
    %v762 = vld [vmem:[#allocation8 + $0x338] sm:$0xff]
    %v763 = vld [vmem:[#allocation8 + $0x340] sm:$0xff]
    %v764 = vld [vmem:[#allocation8 + $0x348] sm:$0xff]
    %v765 = vld [vmem:[#allocation8 + $0x350] sm:$0xff]
    %v766 = vld [vmem:[#allocation8 + $0x358] sm:$0xff]
    %v767 = vld [vmem:[#allocation8 + $0x360] sm:$0xff]
    %v768 = vld [vmem:[#allocation8 + $0x368] sm:$0xff]
    %v769 = vld [vmem:[#allocation8 + $0x370] sm:$0xff]
    %v770 = vld [vmem:[#allocation8 + $0x378] sm:$0xff]
    %v771 = vld [vmem:[#allocation8 + $0x380] sm:$0xff]
    %v772 = vld [vmem:[#allocation8 + $0x388] sm:$0xff]
    %v773 = vld [vmem:[#allocation8 + $0x390] sm:$0xff]
    %v774 = vld [vmem:[#allocation8 + $0x398] sm:$0xff]
    %v775 = vld [vmem:[#allocation8 + $0x3a0] sm:$0xff]
    %v776 = vld [vmem:[#allocation8 + $0x3a8] sm:$0xff]
    %v777 = vld [vmem:[#allocation8 + $0x3b0] sm:$0xff]
    %v778 = vld [vmem:[#allocation8 + $0x3b8] sm:$0xff]
    %v779 = vld [vmem:[#allocation8 + $0x3c0] sm:$0xff]
    %v780 = vld [vmem:[#allocation8 + $0x3c8] sm:$0xff]
    %v781 = vld [vmem:[#allocation8 + $0x3d0] sm:$0xff]
    %v782 = vld [vmem:[#allocation8 + $0x3d8] sm:$0xff]
    %v783 = vld [vmem:[#allocation8 + $0x3e0] sm:$0xff]
    %v784 = vld [vmem:[#allocation8 + $0x3e8] sm:$0xff]
    %v785 = vld [vmem:[#allocation8 + $0x3f0] sm:$0xff]
    %v786 = vld [vmem:[#allocation8 + $0x3f8] sm:$0xff]
    %v787 = vld [vmem:[#allocation8 + $0x400] sm:$0xff]
    %v788 = vld [vmem:[#allocation8 + $0x408] sm:$0xff]
    %v789 = vld [vmem:[#allocation8 + $0x410] sm:$0xff]
    %v790 = vld [vmem:[#allocation8 + $0x418] sm:$0xff]
    %v791 = vld [vmem:[#allocation8 + $0x420] sm:$0xff]
    %v792 = vld [vmem:[#allocation8 + $0x428] sm:$0xff]
    %v793 = vld [vmem:[#allocation8 + $0x430] sm:$0xff]
    %v794 = vld [vmem:[#allocation8 + $0x438] sm:$0xff]
    %v795 = vld [vmem:[#allocation8 + $0x440] sm:$0xff]
    %v796 = vld [vmem:[#allocation8 + $0x448] sm:$0xff]
    %v797 = vld [vmem:[#allocation8 + $0x450] sm:$0xff]
    %v798 = vld [vmem:[#allocation8 + $0x458] sm:$0xff]
    %v799 = vld [vmem:[#allocation8 + $0x460] sm:$0xff]
    %v800 = vld [vmem:[#allocation8 + $0x468] sm:$0xff]
    %v801 = vld [vmem:[#allocation8 + $0x470] sm:$0xff]
    %v802 = vld [vmem:[#allocation8 + $0x478] sm:$0xff]
    %v803 = vld [vmem:[#allocation8 + $0x480] sm:$0xff]
    %v804 = vld [vmem:[#allocation8 + $0x488] sm:$0xff]
    %v805 = vld [vmem:[#allocation8 + $0x490] sm:$0xff]
    %v806 = vld [vmem:[#allocation8 + $0x498] sm:$0xff]
    %v807 = vld [vmem:[#allocation8 + $0x4a0] sm:$0xff]
    %v808 = vld [vmem:[#allocation8 + $0x4a8] sm:$0xff]
    %v809 = vld [vmem:[#allocation8 + $0x4b0] sm:$0xff]
    %v810 = vld [vmem:[#allocation8 + $0x4b8] sm:$0xff]
    %v811 = vld [vmem:[#allocation8 + $0x4c0] sm:$0xff]
    %v812 = vld [vmem:[#allocation8 + $0x4c8] sm:$0xff]
    %v813 = vld [vmem:[#allocation8 + $0x4d0] sm:$0xff]
    %v814 = vld [vmem:[#allocation8 + $0x4d8] sm:$0xff]
    %v815 = vld [vmem:[#allocation8 + $0x4e0] sm:$0xff]
    %v816 = vld [vmem:[#allocation8 + $0x4e8] sm:$0xff]
    %v817 = vld [vmem:[#allocation8 + $0x4f0] sm:$0xff]
    %v818 = vld [vmem:[#allocation8 + $0x4f8] sm:$0xff]
    %v819 = vld [vmem:[#allocation8 + $0x500] sm:$0xff]
    %v820 = vld [vmem:[#allocation8 + $0x508] sm:$0xff]
    %v821 = vld [vmem:[#allocation8 + $0x510] sm:$0xff]
    %v822 = vld [vmem:[#allocation8 + $0x518] sm:$0xff]
    %v823 = vld [vmem:[#allocation8 + $0x520] sm:$0xff]
    %v824 = vld [vmem:[#allocation8 + $0x528] sm:$0xff]
    %v825 = vld [vmem:[#allocation8 + $0x530] sm:$0xff]
    %v826 = vld [vmem:[#allocation8 + $0x538] sm:$0xff]
    %v827 = vld [vmem:[#allocation8 + $0x540] sm:$0xff]
    %v828 = vld [vmem:[#allocation8 + $0x548] sm:$0xff]
    %v829 = vld [vmem:[#allocation8 + $0x550] sm:$0xff]
    %v830 = vld [vmem:[#allocation8 + $0x558] sm:$0xff]
    %v831 = vld [vmem:[#allocation8 + $0x560] sm:$0xff]
    %v832 = vld [vmem:[#allocation8 + $0x568] sm:$0xff]
    %v833 = vld [vmem:[#allocation8 + $0x570] sm:$0xff]
    %v834 = vld [vmem:[#allocation8 + $0x578] sm:$0xff]
    %v835 = vld [vmem:[#allocation8 + $0x580] sm:$0xff]
    %v836 = vld [vmem:[#allocation8 + $0x588] sm:$0xff]
    %v837 = vld [vmem:[#allocation8 + $0x590] sm:$0xff]
    %v838 = vld [vmem:[#allocation8 + $0x598] sm:$0xff]
    %v839 = vld [vmem:[#allocation8 + $0x5a0] sm:$0xff]
    %v840 = vld [vmem:[#allocation8 + $0x5a8] sm:$0xff]
    %v841 = vld [vmem:[#allocation8 + $0x5b0] sm:$0xff]
    %v842 = vld [vmem:[#allocation8 + $0x5b8] sm:$0xff]
    %v843 = vld [vmem:[#allocation8 + $0x5c0] sm:$0xff]
    %v844 = vld [vmem:[#allocation8 + $0x5c8] sm:$0xff]
    %v845 = vld [vmem:[#allocation8 + $0x5d0] sm:$0xff]
    %v846 = vld [vmem:[#allocation8 + $0x5d8] sm:$0xff]
    %v847 = vld [vmem:[#allocation8 + $0x5e0] sm:$0xff]
    %v848 = vld [vmem:[#allocation8 + $0x5e8] sm:$0xff]
    %v849 = vld [vmem:[#allocation8 + $0x5f0] sm:$0xff]
    %v850 = vld [vmem:[#allocation8 + $0x5f8] sm:$0xff]
    %v851 = vld [vmem:[#allocation8 + $0x600] sm:$0xff]
    %v852 = vld [vmem:[#allocation8 + $0x608] sm:$0xff]
    %v853 = vld [vmem:[#allocation8 + $0x610] sm:$0xff]
    %v854 = vld [vmem:[#allocation8 + $0x618] sm:$0xff]
    %v855 = vld [vmem:[#allocation8 + $0x620] sm:$0xff]
    %v856 = vld [vmem:[#allocation8 + $0x628] sm:$0xff]
    %v857 = vld [vmem:[#allocation8 + $0x630] sm:$0xff]
    %v858 = vld [vmem:[#allocation8 + $0x638] sm:$0xff]
    %v859 = vld [vmem:[#allocation8 + $0x640] sm:$0xff]
    %v860 = vld [vmem:[#allocation8 + $0x648] sm:$0xff]
    %v861 = vld [vmem:[#allocation8 + $0x650] sm:$0xff]
    %v862 = vld [vmem:[#allocation8 + $0x658] sm:$0xff]
    %v863 = vld [vmem:[#allocation8 + $0x660] sm:$0xff]
    %v864 = vld [vmem:[#allocation8 + $0x668] sm:$0xff]
    %v865 = vld [vmem:[#allocation8 + $0x670] sm:$0xff]
    %v866 = vld [vmem:[#allocation8 + $0x678] sm:$0xff]
    %v867 = vld [vmem:[#allocation8 + $0x680] sm:$0xff]
    %v868 = vld [vmem:[#allocation8 + $0x688] sm:$0xff]
    %v869 = vld [vmem:[#allocation8 + $0x690] sm:$0xff]
    %v870 = vld [vmem:[#allocation8 + $0x698] sm:$0xff]
    %v871 = vld [vmem:[#allocation8 + $0x6a0] sm:$0xff]
    %v872 = vld [vmem:[#allocation8 + $0x6a8] sm:$0xff]
    %v873 = vld [vmem:[#allocation8 + $0x6b0] sm:$0xff]
    %v874 = vld [vmem:[#allocation8 + $0x6b8] sm:$0xff]
    %v875 = vld [vmem:[#allocation8 + $0x6c0] sm:$0xff]
    %v876 = vld [vmem:[#allocation8 + $0x6c8] sm:$0xff]
    %v877 = vld [vmem:[#allocation8 + $0x6d0] sm:$0xff]
    %v878 = vld [vmem:[#allocation8 + $0x6d8] sm:$0xff]
    %v879 = vld [vmem:[#allocation8 + $0x6e0] sm:$0xff]
    %v880 = vld [vmem:[#allocation8 + $0x6e8] sm:$0xff]
    %v881 = vld [vmem:[#allocation8 + $0x6f0] sm:$0xff]
    %v882 = vld [vmem:[#allocation8 + $0x6f8] sm:$0xff]
    %v883 = vld [vmem:[#allocation8 + $0x700] sm:$0xff]
    %v884 = vld [vmem:[#allocation8 + $0x708] sm:$0xff]
    %v885 = vld [vmem:[#allocation8 + $0x710] sm:$0xff]
    %v886 = vld [vmem:[#allocation8 + $0x718] sm:$0xff]
    %v887 = vld [vmem:[#allocation8 + $0x720] sm:$0xff]
    %v888 = vld [vmem:[#allocation8 + $0x728] sm:$0xff]
    %v889 = vld [vmem:[#allocation8 + $0x730] sm:$0xff]
    %v890 = vld [vmem:[#allocation8 + $0x738] sm:$0xff]
    %v891 = vld [vmem:[#allocation8 + $0x740] sm:$0xff]
    %v892 = vld [vmem:[#allocation8 + $0x748] sm:$0xff]
    %v893 = vld [vmem:[#allocation8 + $0x750] sm:$0xff]
    %v894 = vld [vmem:[#allocation8 + $0x758] sm:$0xff]
    %v895 = vld [vmem:[#allocation8 + $0x760] sm:$0xff]
    %v896 = vld [vmem:[#allocation8 + $0x768] sm:$0xff]
    %v897 = vld [vmem:[#allocation8 + $0x770] sm:$0xff]
    %v898 = vld [vmem:[#allocation8 + $0x778] sm:$0xff]
    %v899 = vld [vmem:[#allocation8 + $0x780] sm:$0xff]
    %v900 = vld [vmem:[#allocation8 + $0x788] sm:$0xff]
    %v901 = vld [vmem:[#allocation8 + $0x790] sm:$0xff]
    %v902 = vld [vmem:[#allocation8 + $0x798] sm:$0xff]
    %v903 = vld [vmem:[#allocation8 + $0x7a0] sm:$0xff]
    %v904 = vld [vmem:[#allocation8 + $0x7a8] sm:$0xff]
    %v905 = vld [vmem:[#allocation8 + $0x7b0] sm:$0xff]
    %v906 = vld [vmem:[#allocation8 + $0x7b8] sm:$0xff]
    %v907 = vld [vmem:[#allocation8 + $0x7c0] sm:$0xff]
    %v908 = vld [vmem:[#allocation8 + $0x7c8] sm:$0xff]
    %v909 = vld [vmem:[#allocation8 + $0x7d0] sm:$0xff]
    %v910 = vld [vmem:[#allocation8 + $0x7d8] sm:$0xff]
    %v911 = vld [vmem:[#allocation8 + $0x7e0] sm:$0xff]
    %v912 = vld [vmem:[#allocation8 + $0x7e8] sm:$0xff]
    %v913 = vld [vmem:[#allocation8 + $0x7f0] sm:$0xff]
    %v914 = vld [vmem:[#allocation8 + $0x7f8] sm:$0xff]
    %v915 = vld [vmem:[#allocation10] sm:$0xf]
    %v917 = vperm.slane %v915, 0
    %v918 = vperm.slane %v915, 1
    %v919 = vperm.slane %v915, 2
    %v920 = vperm.slane %v915, 3
    %v1181 = vunpack.c.l.b16 %v659
    %v1182 = vunpack.c.h.b16 %v659
    %v1183 = vunpack.c.l.b16 %v660
    %v1184 = vunpack.c.h.b16 %v660
    %v1185 = vunpack.c.l.b16 %v661
    %v1186 = vunpack.c.h.b16 %v661
    %v1187 = vunpack.c.l.b16 %v662
    %v1188 = vunpack.c.h.b16 %v662
    %v1189 = vunpack.c.l.b16 %v663
    %v1190 = vunpack.c.h.b16 %v663
    %v1191 = vunpack.c.l.b16 %v664
    %v1192 = vunpack.c.h.b16 %v664
    %v1193 = vunpack.c.l.b16 %v665
    %v1194 = vunpack.c.h.b16 %v665
    %v1195 = vunpack.c.l.b16 %v666
    %v1196 = vunpack.c.h.b16 %v666
    %v1197 = vunpack.c.l.b16 %v667
    %v1198 = vunpack.c.h.b16 %v667
    %v1199 = vunpack.c.l.b16 %v668
    %v1200 = vunpack.c.h.b16 %v668
    %v1201 = vunpack.c.l.b16 %v669
    %v1202 = vunpack.c.h.b16 %v669
    %v1203 = vunpack.c.l.b16 %v670
    %v1204 = vunpack.c.h.b16 %v670
    %v1205 = vunpack.c.l.b16 %v671
    %v1206 = vunpack.c.h.b16 %v671
    %v1207 = vunpack.c.l.b16 %v672
    %v1208 = vunpack.c.h.b16 %v672
    %v1209 = vunpack.c.l.b16 %v673
    %v1210 = vunpack.c.h.b16 %v673
    %v1211 = vunpack.c.l.b16 %v674
    %v1212 = vunpack.c.h.b16 %v674
    %v1213 = vunpack.c.l.b16 %v675
    %v1214 = vunpack.c.h.b16 %v675
    %v1215 = vunpack.c.l.b16 %v676
    %v1216 = vunpack.c.h.b16 %v676
    %v1217 = vunpack.c.l.b16 %v677
    %v1218 = vunpack.c.h.b16 %v677
    %v1219 = vunpack.c.l.b16 %v678
    %v1220 = vunpack.c.h.b16 %v678
    %v1221 = vunpack.c.l.b16 %v679
    %v1222 = vunpack.c.h.b16 %v679
    %v1223 = vunpack.c.l.b16 %v680
    %v1224 = vunpack.c.h.b16 %v680
    %v1225 = vunpack.c.l.b16 %v681
    %v1226 = vunpack.c.h.b16 %v681
    %v1227 = vunpack.c.l.b16 %v682
    %v1228 = vunpack.c.h.b16 %v682
    %v1229 = vunpack.c.l.b16 %v683
    %v1230 = vunpack.c.h.b16 %v683
    %v1231 = vunpack.c.l.b16 %v684
    %v1232 = vunpack.c.h.b16 %v684
    %v1233 = vunpack.c.l.b16 %v685
    %v1234 = vunpack.c.h.b16 %v685
    %v1235 = vunpack.c.l.b16 %v686
    %v1236 = vunpack.c.h.b16 %v686
    %v1237 = vunpack.c.l.b16 %v687
    %v1238 = vunpack.c.h.b16 %v687
    %v1239 = vunpack.c.l.b16 %v688
    %v1240 = vunpack.c.h.b16 %v688
    %v1241 = vunpack.c.l.b16 %v689
    %v1242 = vunpack.c.h.b16 %v689
    %v1243 = vunpack.c.l.b16 %v690
    %v1244 = vunpack.c.h.b16 %v690
    %v1245 = vunpack.c.l.b16 %v691
    %v1246 = vunpack.c.h.b16 %v691
    %v1247 = vunpack.c.l.b16 %v692
    %v1248 = vunpack.c.h.b16 %v692
    %v1249 = vunpack.c.l.b16 %v693
    %v1250 = vunpack.c.h.b16 %v693
    %v1251 = vunpack.c.l.b16 %v694
    %v1252 = vunpack.c.h.b16 %v694
    %v1253 = vunpack.c.l.b16 %v695
    %v1254 = vunpack.c.h.b16 %v695
    %v1255 = vunpack.c.l.b16 %v696
    %v1256 = vunpack.c.h.b16 %v696
    %v1257 = vunpack.c.l.b16 %v697
    %v1258 = vunpack.c.h.b16 %v697
    %v1259 = vunpack.c.l.b16 %v698
    %v1260 = vunpack.c.h.b16 %v698
    %v1261 = vunpack.c.l.b16 %v699
    %v1262 = vunpack.c.h.b16 %v699
    %v1263 = vunpack.c.l.b16 %v700
    %v1264 = vunpack.c.h.b16 %v700
    %v1265 = vunpack.c.l.b16 %v701
    %v1266 = vunpack.c.h.b16 %v701
    %v1267 = vunpack.c.l.b16 %v702
    %v1268 = vunpack.c.h.b16 %v702
    %v1269 = vunpack.c.l.b16 %v703
    %v1270 = vunpack.c.h.b16 %v703
    %v1271 = vunpack.c.l.b16 %v704
    %v1272 = vunpack.c.h.b16 %v704
    %v1273 = vunpack.c.l.b16 %v705
    %v1274 = vunpack.c.h.b16 %v705
    %v1275 = vunpack.c.l.b16 %v706
    %v1276 = vunpack.c.h.b16 %v706
    %v1277 = vunpack.c.l.b16 %v707
    %v1278 = vunpack.c.h.b16 %v707
    %v1279 = vunpack.c.l.b16 %v708
    %v1280 = vunpack.c.h.b16 %v708
    %v1281 = vunpack.c.l.b16 %v709
    %v1282 = vunpack.c.h.b16 %v709
    %v1283 = vunpack.c.l.b16 %v710
    %v1284 = vunpack.c.h.b16 %v710
    %v1285 = vunpack.c.l.b16 %v711
    %v1286 = vunpack.c.h.b16 %v711
    %v1287 = vunpack.c.l.b16 %v712
    %v1288 = vunpack.c.h.b16 %v712
    %v1289 = vunpack.c.l.b16 %v713
    %v1290 = vunpack.c.h.b16 %v713
    %v1291 = vunpack.c.l.b16 %v714
    %v1292 = vunpack.c.h.b16 %v714
    %v1293 = vunpack.c.l.b16 %v715
    %v1294 = vunpack.c.h.b16 %v715
    %v1295 = vunpack.c.l.b16 %v716
    %v1296 = vunpack.c.h.b16 %v716
    %v1297 = vunpack.c.l.b16 %v717
    %v1298 = vunpack.c.h.b16 %v717
    %v1299 = vunpack.c.l.b16 %v718
    %v1300 = vunpack.c.h.b16 %v718
    %v1301 = vunpack.c.l.b16 %v719
    %v1302 = vunpack.c.h.b16 %v719
    %v1303 = vunpack.c.l.b16 %v720
    %v1304 = vunpack.c.h.b16 %v720
    %v1305 = vunpack.c.l.b16 %v721
    %v1306 = vunpack.c.h.b16 %v721
    %v1307 = vunpack.c.l.b16 %v722
    %v1308 = vunpack.c.h.b16 %v722
    %v1309 = vunpack.c.l.b16 %v723
    %v1310 = vunpack.c.h.b16 %v723
    %v1311 = vunpack.c.l.b16 %v724
    %v1312 = vunpack.c.h.b16 %v724
    %v1313 = vunpack.c.l.b16 %v725
    %v1314 = vunpack.c.h.b16 %v725
    %v1315 = vunpack.c.l.b16 %v726
    %v1316 = vunpack.c.h.b16 %v726
    %v1317 = vunpack.c.l.b16 %v727
    %v1318 = vunpack.c.h.b16 %v727
    %v1319 = vunpack.c.l.b16 %v728
    %v1320 = vunpack.c.h.b16 %v728
    %v1321 = vunpack.c.l.b16 %v729
    %v1322 = vunpack.c.h.b16 %v729
    %v1323 = vunpack.c.l.b16 %v730
    %v1324 = vunpack.c.h.b16 %v730
    %v1325 = vunpack.c.l.b16 %v731
    %v1326 = vunpack.c.h.b16 %v731
    %v1327 = vunpack.c.l.b16 %v732
    %v1328 = vunpack.c.h.b16 %v732
    %v1329 = vunpack.c.l.b16 %v733
    %v1330 = vunpack.c.h.b16 %v733
    %v1331 = vunpack.c.l.b16 %v734
    %v1332 = vunpack.c.h.b16 %v734
    %v1333 = vunpack.c.l.b16 %v735
    %v1334 = vunpack.c.h.b16 %v735
    %v1335 = vunpack.c.l.b16 %v736
    %v1336 = vunpack.c.h.b16 %v736
    %v1337 = vunpack.c.l.b16 %v737
    %v1338 = vunpack.c.h.b16 %v737
    %v1339 = vunpack.c.l.b16 %v738
    %v1340 = vunpack.c.h.b16 %v738
    %v1341 = vunpack.c.l.b16 %v739
    %v1342 = vunpack.c.h.b16 %v739
    %v1343 = vunpack.c.l.b16 %v740
    %v1344 = vunpack.c.h.b16 %v740
    %v1345 = vunpack.c.l.b16 %v741
    %v1346 = vunpack.c.h.b16 %v741
    %v1347 = vunpack.c.l.b16 %v742
    %v1348 = vunpack.c.h.b16 %v742
    %v1349 = vunpack.c.l.b16 %v743
    %v1350 = vunpack.c.h.b16 %v743
    %v1351 = vunpack.c.l.b16 %v744
    %v1352 = vunpack.c.h.b16 %v744
    %v1353 = vunpack.c.l.b16 %v745
    %v1354 = vunpack.c.h.b16 %v745
    %v1355 = vunpack.c.l.b16 %v746
    %v1356 = vunpack.c.h.b16 %v746
    %v1357 = vunpack.c.l.b16 %v747
    %v1358 = vunpack.c.h.b16 %v747
    %v1359 = vunpack.c.l.b16 %v748
    %v1360 = vunpack.c.h.b16 %v748
    %v1361 = vunpack.c.l.b16 %v749
    %v1362 = vunpack.c.h.b16 %v749
    %v1363 = vunpack.c.l.b16 %v750
    %v1364 = vunpack.c.h.b16 %v750
    %v1365 = vunpack.c.l.b16 %v751
    %v1366 = vunpack.c.h.b16 %v751
    %v1367 = vunpack.c.l.b16 %v752
    %v1368 = vunpack.c.h.b16 %v752
    %v1369 = vunpack.c.l.b16 %v753
    %v1370 = vunpack.c.h.b16 %v753
    %v1371 = vunpack.c.l.b16 %v754
    %v1372 = vunpack.c.h.b16 %v754
    %v1373 = vunpack.c.l.b16 %v755
    %v1374 = vunpack.c.h.b16 %v755
    %v1375 = vunpack.c.l.b16 %v756
    %v1376 = vunpack.c.h.b16 %v756
    %v1377 = vunpack.c.l.b16 %v757
    %v1378 = vunpack.c.h.b16 %v757
    %v1379 = vunpack.c.l.b16 %v758
    %v1380 = vunpack.c.h.b16 %v758
    %v1381 = vunpack.c.l.b16 %v759
    %v1382 = vunpack.c.h.b16 %v759
    %v1383 = vunpack.c.l.b16 %v760
    %v1384 = vunpack.c.h.b16 %v760
    %v1385 = vunpack.c.l.b16 %v761
    %v1386 = vunpack.c.h.b16 %v761
    %v1387 = vunpack.c.l.b16 %v762
    %v1388 = vunpack.c.h.b16 %v762
    %v1389 = vunpack.c.l.b16 %v763
    %v1390 = vunpack.c.h.b16 %v763
    %v1391 = vunpack.c.l.b16 %v764
    %v1392 = vunpack.c.h.b16 %v764
    %v1393 = vunpack.c.l.b16 %v765
    %v1394 = vunpack.c.h.b16 %v765
    %v1395 = vunpack.c.l.b16 %v766
    %v1396 = vunpack.c.h.b16 %v766
    %v1397 = vunpack.c.l.b16 %v767
    %v1398 = vunpack.c.h.b16 %v767
    %v1399 = vunpack.c.l.b16 %v768
    %v1400 = vunpack.c.h.b16 %v768
    %v1401 = vunpack.c.l.b16 %v769
    %v1402 = vunpack.c.h.b16 %v769
    %v1403 = vunpack.c.l.b16 %v770
    %v1404 = vunpack.c.h.b16 %v770
    %v1405 = vunpack.c.l.b16 %v771
    %v1406 = vunpack.c.h.b16 %v771
    %v1407 = vunpack.c.l.b16 %v772
    %v1408 = vunpack.c.h.b16 %v772
    %v1409 = vunpack.c.l.b16 %v773
    %v1410 = vunpack.c.h.b16 %v773
    %v1411 = vunpack.c.l.b16 %v774
    %v1412 = vunpack.c.h.b16 %v774
    %v1413 = vunpack.c.l.b16 %v775
    %v1414 = vunpack.c.h.b16 %v775
    %v1415 = vunpack.c.l.b16 %v776
    %v1416 = vunpack.c.h.b16 %v776
    %v1417 = vunpack.c.l.b16 %v777
    %v1418 = vunpack.c.h.b16 %v777
    %v1419 = vunpack.c.l.b16 %v778
    %v1420 = vunpack.c.h.b16 %v778
    %v1421 = vunpack.c.l.b16 %v779
    %v1422 = vunpack.c.h.b16 %v779
    %v1423 = vunpack.c.l.b16 %v780
    %v1424 = vunpack.c.h.b16 %v780
    %v1425 = vunpack.c.l.b16 %v781
    %v1426 = vunpack.c.h.b16 %v781
    %v1427 = vunpack.c.l.b16 %v782
    %v1428 = vunpack.c.h.b16 %v782
    %v1429 = vunpack.c.l.b16 %v783
    %v1430 = vunpack.c.h.b16 %v783
    %v1431 = vunpack.c.l.b16 %v784
    %v1432 = vunpack.c.h.b16 %v784
    %v1433 = vunpack.c.l.b16 %v785
    %v1434 = vunpack.c.h.b16 %v785
    %v1435 = vunpack.c.l.b16 %v786
    %v1436 = vunpack.c.h.b16 %v786
    %v1437 = vunpack.c.l.b16 %v787
    %v1438 = vunpack.c.h.b16 %v787
    %v1439 = vunpack.c.l.b16 %v788
    %v1440 = vunpack.c.h.b16 %v788
    %v1441 = vunpack.c.l.b16 %v789
    %v1442 = vunpack.c.h.b16 %v789
    %v1443 = vunpack.c.l.b16 %v790
    %v1444 = vunpack.c.h.b16 %v790
    %v1445 = vunpack.c.l.b16 %v791
    %v1446 = vunpack.c.h.b16 %v791
    %v1447 = vunpack.c.l.b16 %v792
    %v1448 = vunpack.c.h.b16 %v792
    %v1449 = vunpack.c.l.b16 %v793
    %v1450 = vunpack.c.h.b16 %v793
    %v1451 = vunpack.c.l.b16 %v794
    %v1452 = vunpack.c.h.b16 %v794
    %v1453 = vunpack.c.l.b16 %v795
    %v1454 = vunpack.c.h.b16 %v795
    %v1455 = vunpack.c.l.b16 %v796
    %v1456 = vunpack.c.h.b16 %v796
    %v1457 = vunpack.c.l.b16 %v797
    %v1458 = vunpack.c.h.b16 %v797
    %v1459 = vunpack.c.l.b16 %v798
    %v1460 = vunpack.c.h.b16 %v798
    %v1461 = vunpack.c.l.b16 %v799
    %v1462 = vunpack.c.h.b16 %v799
    %v1463 = vunpack.c.l.b16 %v800
    %v1464 = vunpack.c.h.b16 %v800
    %v1465 = vunpack.c.l.b16 %v801
    %v1466 = vunpack.c.h.b16 %v801
    %v1467 = vunpack.c.l.b16 %v802
    %v1468 = vunpack.c.h.b16 %v802
    %v1469 = vunpack.c.l.b16 %v803
    %v1470 = vunpack.c.h.b16 %v803
    %v1471 = vunpack.c.l.b16 %v804
    %v1472 = vunpack.c.h.b16 %v804
    %v1473 = vunpack.c.l.b16 %v805
    %v1474 = vunpack.c.h.b16 %v805
    %v1475 = vunpack.c.l.b16 %v806
    %v1476 = vunpack.c.h.b16 %v806
    %v1477 = vunpack.c.l.b16 %v807
    %v1478 = vunpack.c.h.b16 %v807
    %v1479 = vunpack.c.l.b16 %v808
    %v1480 = vunpack.c.h.b16 %v808
    %v1481 = vunpack.c.l.b16 %v809
    %v1482 = vunpack.c.h.b16 %v809
    %v1483 = vunpack.c.l.b16 %v810
    %v1484 = vunpack.c.h.b16 %v810
    %v1485 = vunpack.c.l.b16 %v811
    %v1486 = vunpack.c.h.b16 %v811
    %v1487 = vunpack.c.l.b16 %v812
    %v1488 = vunpack.c.h.b16 %v812
    %v1489 = vunpack.c.l.b16 %v813
    %v1490 = vunpack.c.h.b16 %v813
    %v1491 = vunpack.c.l.b16 %v814
    %v1492 = vunpack.c.h.b16 %v814
    %v1493 = vunpack.c.l.b16 %v815
    %v1494 = vunpack.c.h.b16 %v815
    %v1495 = vunpack.c.l.b16 %v816
    %v1496 = vunpack.c.h.b16 %v816
    %v1497 = vunpack.c.l.b16 %v817
    %v1498 = vunpack.c.h.b16 %v817
    %v1499 = vunpack.c.l.b16 %v818
    %v1500 = vunpack.c.h.b16 %v818
    %v1501 = vunpack.c.l.b16 %v819
    %v1502 = vunpack.c.h.b16 %v819
    %v1503 = vunpack.c.l.b16 %v820
    %v1504 = vunpack.c.h.b16 %v820
    %v1505 = vunpack.c.l.b16 %v821
    %v1506 = vunpack.c.h.b16 %v821
    %v1507 = vunpack.c.l.b16 %v822
    %v1508 = vunpack.c.h.b16 %v822
    %v1509 = vunpack.c.l.b16 %v823
    %v1510 = vunpack.c.h.b16 %v823
    %v1511 = vunpack.c.l.b16 %v824
    %v1512 = vunpack.c.h.b16 %v824
    %v1513 = vunpack.c.l.b16 %v825
    %v1514 = vunpack.c.h.b16 %v825
    %v1515 = vunpack.c.l.b16 %v826
    %v1516 = vunpack.c.h.b16 %v826
    %v1517 = vunpack.c.l.b16 %v827
    %v1518 = vunpack.c.h.b16 %v827
    %v1519 = vunpack.c.l.b16 %v828
    %v1520 = vunpack.c.h.b16 %v828
    %v1521 = vunpack.c.l.b16 %v829
    %v1522 = vunpack.c.h.b16 %v829
    %v1523 = vunpack.c.l.b16 %v830
    %v1524 = vunpack.c.h.b16 %v830
    %v1525 = vunpack.c.l.b16 %v831
    %v1526 = vunpack.c.h.b16 %v831
    %v1527 = vunpack.c.l.b16 %v832
    %v1528 = vunpack.c.h.b16 %v832
    %v1529 = vunpack.c.l.b16 %v833
    %v1530 = vunpack.c.h.b16 %v833
    %v1531 = vunpack.c.l.b16 %v834
    %v1532 = vunpack.c.h.b16 %v834
    %v1533 = vunpack.c.l.b16 %v835
    %v1534 = vunpack.c.h.b16 %v835
    %v1535 = vunpack.c.l.b16 %v836
    %v1536 = vunpack.c.h.b16 %v836
    %v1537 = vunpack.c.l.b16 %v837
    %v1538 = vunpack.c.h.b16 %v837
    %v1539 = vunpack.c.l.b16 %v838
    %v1540 = vunpack.c.h.b16 %v838
    %v1541 = vunpack.c.l.b16 %v839
    %v1542 = vunpack.c.h.b16 %v839
    %v1543 = vunpack.c.l.b16 %v840
    %v1544 = vunpack.c.h.b16 %v840
    %v1545 = vunpack.c.l.b16 %v841
    %v1546 = vunpack.c.h.b16 %v841
    %v1547 = vunpack.c.l.b16 %v842
    %v1548 = vunpack.c.h.b16 %v842
    %v1549 = vunpack.c.l.b16 %v843
    %v1550 = vunpack.c.h.b16 %v843
    %v1551 = vunpack.c.l.b16 %v844
    %v1552 = vunpack.c.h.b16 %v844
    %v1553 = vunpack.c.l.b16 %v845
    %v1554 = vunpack.c.h.b16 %v845
    %v1555 = vunpack.c.l.b16 %v846
    %v1556 = vunpack.c.h.b16 %v846
    %v1557 = vunpack.c.l.b16 %v847
    %v1558 = vunpack.c.h.b16 %v847
    %v1559 = vunpack.c.l.b16 %v848
    %v1560 = vunpack.c.h.b16 %v848
    %v1561 = vunpack.c.l.b16 %v849
    %v1562 = vunpack.c.h.b16 %v849
    %v1563 = vunpack.c.l.b16 %v850
    %v1564 = vunpack.c.h.b16 %v850
    %v1565 = vunpack.c.l.b16 %v851
    %v1566 = vunpack.c.h.b16 %v851
    %v1567 = vunpack.c.l.b16 %v852
    %v1568 = vunpack.c.h.b16 %v852
    %v1569 = vunpack.c.l.b16 %v853
    %v1570 = vunpack.c.h.b16 %v853
    %v1571 = vunpack.c.l.b16 %v854
    %v1572 = vunpack.c.h.b16 %v854
    %v1573 = vunpack.c.l.b16 %v855
    %v1574 = vunpack.c.h.b16 %v855
    %v1575 = vunpack.c.l.b16 %v856
    %v1576 = vunpack.c.h.b16 %v856
    %v1577 = vunpack.c.l.b16 %v857
    %v1578 = vunpack.c.h.b16 %v857
    %v1579 = vunpack.c.l.b16 %v858
    %v1580 = vunpack.c.h.b16 %v858
    %v1581 = vunpack.c.l.b16 %v859
    %v1582 = vunpack.c.h.b16 %v859
    %v1583 = vunpack.c.l.b16 %v860
    %v1584 = vunpack.c.h.b16 %v860
    %v1585 = vunpack.c.l.b16 %v861
    %v1586 = vunpack.c.h.b16 %v861
    %v1587 = vunpack.c.l.b16 %v862
    %v1588 = vunpack.c.h.b16 %v862
    %v1589 = vunpack.c.l.b16 %v863
    %v1590 = vunpack.c.h.b16 %v863
    %v1591 = vunpack.c.l.b16 %v864
    %v1592 = vunpack.c.h.b16 %v864
    %v1593 = vunpack.c.l.b16 %v865
    %v1594 = vunpack.c.h.b16 %v865
    %v1595 = vunpack.c.l.b16 %v866
    %v1596 = vunpack.c.h.b16 %v866
    %v1597 = vunpack.c.l.b16 %v867
    %v1598 = vunpack.c.h.b16 %v867
    %v1599 = vunpack.c.l.b16 %v868
    %v1600 = vunpack.c.h.b16 %v868
    %v1601 = vunpack.c.l.b16 %v869
    %v1602 = vunpack.c.h.b16 %v869
    %v1603 = vunpack.c.l.b16 %v870
    %v1604 = vunpack.c.h.b16 %v870
    %v1605 = vunpack.c.l.b16 %v871
    %v1606 = vunpack.c.h.b16 %v871
    %v1607 = vunpack.c.l.b16 %v872
    %v1608 = vunpack.c.h.b16 %v872
    %v1609 = vunpack.c.l.b16 %v873
    %v1610 = vunpack.c.h.b16 %v873
    %v1611 = vunpack.c.l.b16 %v874
    %v1612 = vunpack.c.h.b16 %v874
    %v1613 = vunpack.c.l.b16 %v875
    %v1614 = vunpack.c.h.b16 %v875
    %v1615 = vunpack.c.l.b16 %v876
    %v1616 = vunpack.c.h.b16 %v876
    %v1617 = vunpack.c.l.b16 %v877
    %v1618 = vunpack.c.h.b16 %v877
    %v1619 = vunpack.c.l.b16 %v878
    %v1620 = vunpack.c.h.b16 %v878
    %v1621 = vunpack.c.l.b16 %v879
    %v1622 = vunpack.c.h.b16 %v879
    %v1623 = vunpack.c.l.b16 %v880
    %v1624 = vunpack.c.h.b16 %v880
    %v1625 = vunpack.c.l.b16 %v881
    %v1626 = vunpack.c.h.b16 %v881
    %v1627 = vunpack.c.l.b16 %v882
    %v1628 = vunpack.c.h.b16 %v882
    %v1629 = vunpack.c.l.b16 %v883
    %v1630 = vunpack.c.h.b16 %v883
    %v1631 = vunpack.c.l.b16 %v884
    %v1632 = vunpack.c.h.b16 %v884
    %v1633 = vunpack.c.l.b16 %v885
    %v1634 = vunpack.c.h.b16 %v885
    %v1635 = vunpack.c.l.b16 %v886
    %v1636 = vunpack.c.h.b16 %v886
    %v1637 = vunpack.c.l.b16 %v887
    %v1638 = vunpack.c.h.b16 %v887
    %v1639 = vunpack.c.l.b16 %v888
    %v1640 = vunpack.c.h.b16 %v888
    %v1641 = vunpack.c.l.b16 %v889
    %v1642 = vunpack.c.h.b16 %v889
    %v1643 = vunpack.c.l.b16 %v890
    %v1644 = vunpack.c.h.b16 %v890
    %v1645 = vunpack.c.l.b16 %v891
    %v1646 = vunpack.c.h.b16 %v891
    %v1647 = vunpack.c.l.b16 %v892
    %v1648 = vunpack.c.h.b16 %v892
    %v1649 = vunpack.c.l.b16 %v893
    %v1650 = vunpack.c.h.b16 %v893
    %v1651 = vunpack.c.l.b16 %v894
    %v1652 = vunpack.c.h.b16 %v894
    %v1653 = vunpack.c.l.b16 %v895
    %v1654 = vunpack.c.h.b16 %v895
    %v1655 = vunpack.c.l.b16 %v896
    %v1656 = vunpack.c.h.b16 %v896
    %v1657 = vunpack.c.l.b16 %v897
    %v1658 = vunpack.c.h.b16 %v897
    %v1659 = vunpack.c.l.b16 %v898
    %v1660 = vunpack.c.h.b16 %v898
    %v1661 = vunpack.c.l.b16 %v899
    %v1662 = vunpack.c.h.b16 %v899
    %v1663 = vunpack.c.l.b16 %v900
    %v1664 = vunpack.c.h.b16 %v900
    %v1665 = vunpack.c.l.b16 %v901
    %v1666 = vunpack.c.h.b16 %v901
    %v1667 = vunpack.c.l.b16 %v902
    %v1668 = vunpack.c.h.b16 %v902
    %v1669 = vunpack.c.l.b16 %v903
    %v1670 = vunpack.c.h.b16 %v903
    %v1671 = vunpack.c.l.b16 %v904
    %v1672 = vunpack.c.h.b16 %v904
    %v1673 = vunpack.c.l.b16 %v905
    %v1674 = vunpack.c.h.b16 %v905
    %v1675 = vunpack.c.l.b16 %v906
    %v1676 = vunpack.c.h.b16 %v906
    %v1677 = vunpack.c.l.b16 %v907
    %v1678 = vunpack.c.h.b16 %v907
    %v1679 = vunpack.c.l.b16 %v908
    %v1680 = vunpack.c.h.b16 %v908
    %v1681 = vunpack.c.l.b16 %v909
    %v1682 = vunpack.c.h.b16 %v909
    %v1683 = vunpack.c.l.b16 %v910
    %v1684 = vunpack.c.h.b16 %v910
    %v1685 = vunpack.c.l.b16 %v911
    %v1686 = vunpack.c.h.b16 %v911
    %v1687 = vunpack.c.l.b16 %v912
    %v1688 = vunpack.c.h.b16 %v912
    %v1689 = vunpack.c.l.b16 %v913
    %v1690 = vunpack.c.h.b16 %v913
    %v1691 = vunpack.c.l.b16 %v914
    %v1692 = vunpack.c.h.b16 %v914
    %v1693 = vpack.c.b16 %v1185, %v1181
    %v1694 = vpack.c.b16 %v1186, %v1182
    %v1695 = vpack.c.b16 %v1187, %v1183
    %v1696 = vpack.c.b16 %v1188, %v1184
    %v1697 = vpack.c.b16 %v1193, %v1189
    %v1698 = vpack.c.b16 %v1194, %v1190
    %v1699 = vpack.c.b16 %v1195, %v1191
    %v1700 = vpack.c.b16 %v1196, %v1192
    %v1701 = vpack.c.b16 %v1201, %v1197
    %v1702 = vpack.c.b16 %v1202, %v1198
    %v1703 = vpack.c.b16 %v1203, %v1199
    %v1704 = vpack.c.b16 %v1204, %v1200
    %v1705 = vpack.c.b16 %v1209, %v1205
    %v1706 = vpack.c.b16 %v1210, %v1206
    %v1707 = vpack.c.b16 %v1211, %v1207
    %v1708 = vpack.c.b16 %v1212, %v1208
    %v1709 = vpack.c.b16 %v1217, %v1213
    %v1710 = vpack.c.b16 %v1218, %v1214
    %v1711 = vpack.c.b16 %v1219, %v1215
    %v1712 = vpack.c.b16 %v1220, %v1216
    %v1713 = vpack.c.b16 %v1225, %v1221
    %v1714 = vpack.c.b16 %v1226, %v1222
    %v1715 = vpack.c.b16 %v1227, %v1223
    %v1716 = vpack.c.b16 %v1228, %v1224
    %v1717 = vpack.c.b16 %v1233, %v1229
    %v1718 = vpack.c.b16 %v1234, %v1230
    %v1719 = vpack.c.b16 %v1235, %v1231
    %v1720 = vpack.c.b16 %v1236, %v1232
    %v1721 = vpack.c.b16 %v1241, %v1237
    %v1722 = vpack.c.b16 %v1242, %v1238
    %v1723 = vpack.c.b16 %v1243, %v1239
    %v1724 = vpack.c.b16 %v1244, %v1240
    %v1725 = vpack.c.b16 %v1249, %v1245
    %v1726 = vpack.c.b16 %v1250, %v1246
    %v1727 = vpack.c.b16 %v1251, %v1247
    %v1728 = vpack.c.b16 %v1252, %v1248
    %v1729 = vpack.c.b16 %v1257, %v1253
    %v1730 = vpack.c.b16 %v1258, %v1254
    %v1731 = vpack.c.b16 %v1259, %v1255
    %v1732 = vpack.c.b16 %v1260, %v1256
    %v1733 = vpack.c.b16 %v1265, %v1261
    %v1734 = vpack.c.b16 %v1266, %v1262
    %v1735 = vpack.c.b16 %v1267, %v1263
    %v1736 = vpack.c.b16 %v1268, %v1264
    %v1737 = vpack.c.b16 %v1273, %v1269
    %v1738 = vpack.c.b16 %v1274, %v1270
    %v1739 = vpack.c.b16 %v1275, %v1271
    %v1740 = vpack.c.b16 %v1276, %v1272
    %v1741 = vpack.c.b16 %v1281, %v1277
    %v1742 = vpack.c.b16 %v1282, %v1278
    %v1743 = vpack.c.b16 %v1283, %v1279
    %v1744 = vpack.c.b16 %v1284, %v1280
    %v1745 = vpack.c.b16 %v1289, %v1285
    %v1746 = vpack.c.b16 %v1290, %v1286
    %v1747 = vpack.c.b16 %v1291, %v1287
    %v1748 = vpack.c.b16 %v1292, %v1288
    %v1749 = vpack.c.b16 %v1297, %v1293
    %v1750 = vpack.c.b16 %v1298, %v1294
    %v1751 = vpack.c.b16 %v1299, %v1295
    %v1752 = vpack.c.b16 %v1300, %v1296
    %v1753 = vpack.c.b16 %v1305, %v1301
    %v1754 = vpack.c.b16 %v1306, %v1302
    %v1755 = vpack.c.b16 %v1307, %v1303
    %v1756 = vpack.c.b16 %v1308, %v1304
    %v1757 = vpack.c.b16 %v1313, %v1309
    %v1758 = vpack.c.b16 %v1314, %v1310
    %v1759 = vpack.c.b16 %v1315, %v1311
    %v1760 = vpack.c.b16 %v1316, %v1312
    %v1761 = vpack.c.b16 %v1321, %v1317
    %v1762 = vpack.c.b16 %v1322, %v1318
    %v1763 = vpack.c.b16 %v1323, %v1319
    %v1764 = vpack.c.b16 %v1324, %v1320
    %v1765 = vpack.c.b16 %v1329, %v1325
    %v1766 = vpack.c.b16 %v1330, %v1326
    %v1767 = vpack.c.b16 %v1331, %v1327
    %v1768 = vpack.c.b16 %v1332, %v1328
    %v1769 = vpack.c.b16 %v1337, %v1333
    %v1770 = vpack.c.b16 %v1338, %v1334
    %v1771 = vpack.c.b16 %v1339, %v1335
    %v1772 = vpack.c.b16 %v1340, %v1336
    %v1773 = vpack.c.b16 %v1345, %v1341
    %v1774 = vpack.c.b16 %v1346, %v1342
    %v1775 = vpack.c.b16 %v1347, %v1343
    %v1776 = vpack.c.b16 %v1348, %v1344
    %v1777 = vpack.c.b16 %v1353, %v1349
    %v1778 = vpack.c.b16 %v1354, %v1350
    %v1779 = vpack.c.b16 %v1355, %v1351
    %v1780 = vpack.c.b16 %v1356, %v1352
    %v1781 = vpack.c.b16 %v1361, %v1357
    %v1782 = vpack.c.b16 %v1362, %v1358
    %v1783 = vpack.c.b16 %v1363, %v1359
    %v1784 = vpack.c.b16 %v1364, %v1360
    %v1785 = vpack.c.b16 %v1369, %v1365
    %v1786 = vpack.c.b16 %v1370, %v1366
    %v1787 = vpack.c.b16 %v1371, %v1367
    %v1788 = vpack.c.b16 %v1372, %v1368
    %v1789 = vpack.c.b16 %v1377, %v1373
    %v1790 = vpack.c.b16 %v1378, %v1374
    %v1791 = vpack.c.b16 %v1379, %v1375
    %v1792 = vpack.c.b16 %v1380, %v1376
    %v1793 = vpack.c.b16 %v1385, %v1381
    %v1794 = vpack.c.b16 %v1386, %v1382
    %v1795 = vpack.c.b16 %v1387, %v1383
    %v1796 = vpack.c.b16 %v1388, %v1384
    %v1797 = vpack.c.b16 %v1393, %v1389
    %v1798 = vpack.c.b16 %v1394, %v1390
    %v1799 = vpack.c.b16 %v1395, %v1391
    %v1800 = vpack.c.b16 %v1396, %v1392
    %v1801 = vpack.c.b16 %v1401, %v1397
    %v1802 = vpack.c.b16 %v1402, %v1398
    %v1803 = vpack.c.b16 %v1403, %v1399
    %v1804 = vpack.c.b16 %v1404, %v1400
    %v1805 = vpack.c.b16 %v1409, %v1405
    %v1806 = vpack.c.b16 %v1410, %v1406
    %v1807 = vpack.c.b16 %v1411, %v1407
    %v1808 = vpack.c.b16 %v1412, %v1408
    %v1809 = vpack.c.b16 %v1417, %v1413
    %v1810 = vpack.c.b16 %v1418, %v1414
    %v1811 = vpack.c.b16 %v1419, %v1415
    %v1812 = vpack.c.b16 %v1420, %v1416
    %v1813 = vpack.c.b16 %v1425, %v1421
    %v1814 = vpack.c.b16 %v1426, %v1422
    %v1815 = vpack.c.b16 %v1427, %v1423
    %v1816 = vpack.c.b16 %v1428, %v1424
    %v1817 = vpack.c.b16 %v1433, %v1429
    %v1818 = vpack.c.b16 %v1434, %v1430
    %v1819 = vpack.c.b16 %v1435, %v1431
    %v1820 = vpack.c.b16 %v1436, %v1432
    %v1821 = vpack.c.b16 %v1441, %v1437
    %v1822 = vpack.c.b16 %v1442, %v1438
    %v1823 = vpack.c.b16 %v1443, %v1439
    %v1824 = vpack.c.b16 %v1444, %v1440
    %v1825 = vpack.c.b16 %v1449, %v1445
    %v1826 = vpack.c.b16 %v1450, %v1446
    %v1827 = vpack.c.b16 %v1451, %v1447
    %v1828 = vpack.c.b16 %v1452, %v1448
    %v1829 = vpack.c.b16 %v1457, %v1453
    %v1830 = vpack.c.b16 %v1458, %v1454
    %v1831 = vpack.c.b16 %v1459, %v1455
    %v1832 = vpack.c.b16 %v1460, %v1456
    %v1833 = vpack.c.b16 %v1465, %v1461
    %v1834 = vpack.c.b16 %v1466, %v1462
    %v1835 = vpack.c.b16 %v1467, %v1463
    %v1836 = vpack.c.b16 %v1468, %v1464
    %v1837 = vpack.c.b16 %v1473, %v1469
    %v1838 = vpack.c.b16 %v1474, %v1470
    %v1839 = vpack.c.b16 %v1475, %v1471
    %v1840 = vpack.c.b16 %v1476, %v1472
    %v1841 = vpack.c.b16 %v1481, %v1477
    %v1842 = vpack.c.b16 %v1482, %v1478
    %v1843 = vpack.c.b16 %v1483, %v1479
    %v1844 = vpack.c.b16 %v1484, %v1480
    %v1845 = vpack.c.b16 %v1489, %v1485
    %v1846 = vpack.c.b16 %v1490, %v1486
    %v1847 = vpack.c.b16 %v1491, %v1487
    %v1848 = vpack.c.b16 %v1492, %v1488
    %v1849 = vpack.c.b16 %v1497, %v1493
    %v1850 = vpack.c.b16 %v1498, %v1494
    %v1851 = vpack.c.b16 %v1499, %v1495
    %v1852 = vpack.c.b16 %v1500, %v1496
    %v1853 = vpack.c.b16 %v1505, %v1501
    %v1854 = vpack.c.b16 %v1506, %v1502
    %v1855 = vpack.c.b16 %v1507, %v1503
    %v1856 = vpack.c.b16 %v1508, %v1504
    %v1857 = vpack.c.b16 %v1513, %v1509
    %v1858 = vpack.c.b16 %v1514, %v1510
    %v1859 = vpack.c.b16 %v1515, %v1511
    %v1860 = vpack.c.b16 %v1516, %v1512
    %v1861 = vpack.c.b16 %v1521, %v1517
    %v1862 = vpack.c.b16 %v1522, %v1518
    %v1863 = vpack.c.b16 %v1523, %v1519
    %v1864 = vpack.c.b16 %v1524, %v1520
    %v1865 = vpack.c.b16 %v1529, %v1525
    %v1866 = vpack.c.b16 %v1530, %v1526
    %v1867 = vpack.c.b16 %v1531, %v1527
    %v1868 = vpack.c.b16 %v1532, %v1528
    %v1869 = vpack.c.b16 %v1537, %v1533
    %v1870 = vpack.c.b16 %v1538, %v1534
    %v1871 = vpack.c.b16 %v1539, %v1535
    %v1872 = vpack.c.b16 %v1540, %v1536
    %v1873 = vpack.c.b16 %v1545, %v1541
    %v1874 = vpack.c.b16 %v1546, %v1542
    %v1875 = vpack.c.b16 %v1547, %v1543
    %v1876 = vpack.c.b16 %v1548, %v1544
    %v1877 = vpack.c.b16 %v1553, %v1549
    %v1878 = vpack.c.b16 %v1554, %v1550
    %v1879 = vpack.c.b16 %v1555, %v1551
    %v1880 = vpack.c.b16 %v1556, %v1552
    %v1881 = vpack.c.b16 %v1561, %v1557
    %v1882 = vpack.c.b16 %v1562, %v1558
    %v1883 = vpack.c.b16 %v1563, %v1559
    %v1884 = vpack.c.b16 %v1564, %v1560
    %v1885 = vpack.c.b16 %v1569, %v1565
    %v1886 = vpack.c.b16 %v1570, %v1566
    %v1887 = vpack.c.b16 %v1571, %v1567
    %v1888 = vpack.c.b16 %v1572, %v1568
    %v1889 = vpack.c.b16 %v1577, %v1573
    %v1890 = vpack.c.b16 %v1578, %v1574
    %v1891 = vpack.c.b16 %v1579, %v1575
    %v1892 = vpack.c.b16 %v1580, %v1576
    %v1893 = vpack.c.b16 %v1585, %v1581
    %v1894 = vpack.c.b16 %v1586, %v1582
    %v1895 = vpack.c.b16 %v1587, %v1583
    %v1896 = vpack.c.b16 %v1588, %v1584
    %v1897 = vpack.c.b16 %v1593, %v1589
    %v1898 = vpack.c.b16 %v1594, %v1590
    %v1899 = vpack.c.b16 %v1595, %v1591
    %v1900 = vpack.c.b16 %v1596, %v1592
    %v1901 = vpack.c.b16 %v1601, %v1597
    %v1902 = vpack.c.b16 %v1602, %v1598
    %v1903 = vpack.c.b16 %v1603, %v1599
    %v1904 = vpack.c.b16 %v1604, %v1600
    %v1905 = vpack.c.b16 %v1609, %v1605
    %v1906 = vpack.c.b16 %v1610, %v1606
    %v1907 = vpack.c.b16 %v1611, %v1607
    %v1908 = vpack.c.b16 %v1612, %v1608
    %v1909 = vpack.c.b16 %v1617, %v1613
    %v1910 = vpack.c.b16 %v1618, %v1614
    %v1911 = vpack.c.b16 %v1619, %v1615
    %v1912 = vpack.c.b16 %v1620, %v1616
    %v1913 = vpack.c.b16 %v1625, %v1621
    %v1914 = vpack.c.b16 %v1626, %v1622
    %v1915 = vpack.c.b16 %v1627, %v1623
    %v1916 = vpack.c.b16 %v1628, %v1624
    %v1917 = vpack.c.b16 %v1633, %v1629
    %v1918 = vpack.c.b16 %v1634, %v1630
    %v1919 = vpack.c.b16 %v1635, %v1631
    %v1920 = vpack.c.b16 %v1636, %v1632
    %v1921 = vpack.c.b16 %v1641, %v1637
    %v1922 = vpack.c.b16 %v1642, %v1638
    %v1923 = vpack.c.b16 %v1643, %v1639
    %v1924 = vpack.c.b16 %v1644, %v1640
    %v1925 = vpack.c.b16 %v1649, %v1645
    %v1926 = vpack.c.b16 %v1650, %v1646
    %v1927 = vpack.c.b16 %v1651, %v1647
    %v1928 = vpack.c.b16 %v1652, %v1648
    %v1929 = vpack.c.b16 %v1657, %v1653
    %v1930 = vpack.c.b16 %v1658, %v1654
    %v1931 = vpack.c.b16 %v1659, %v1655
    %v1932 = vpack.c.b16 %v1660, %v1656
    %v1933 = vpack.c.b16 %v1665, %v1661
    %v1934 = vpack.c.b16 %v1666, %v1662
    %v1935 = vpack.c.b16 %v1667, %v1663
    %v1936 = vpack.c.b16 %v1668, %v1664
    %v1937 = vpack.c.b16 %v1673, %v1669
    %v1938 = vpack.c.b16 %v1674, %v1670
    %v1939 = vpack.c.b16 %v1675, %v1671
    %v1940 = vpack.c.b16 %v1676, %v1672
    %v1941 = vpack.c.b16 %v1681, %v1677
    %v1942 = vpack.c.b16 %v1682, %v1678
    %v1943 = vpack.c.b16 %v1683, %v1679
    %v1944 = vpack.c.b16 %v1684, %v1680
    %v1945 = vpack.c.b16 %v1689, %v1685
    %v1946 = vpack.c.b16 %v1690, %v1686
    %v1947 = vpack.c.b16 %v1691, %v1687
    %v1948 = vpack.c.b16 %v1692, %v1688
    %2205 = vmatpush.bf16.msra.mxu0 %v1721
    %2206 = vmatpush.bf16.msra.mxu0 %v1717
    %2207 = vmatpush.bf16.msra.mxu0 %v1713
    %2208 = vmatpush.bf16.msra.mxu0 %v1709
    %2209 = vmatpush.bf16.msra.mxu0 %v1705
    %2210 = vmatpush.bf16.msra.mxu0 %v1701
    %2211 = vmatpush.bf16.msra.mxu0 %v1697
    %2212 = vmatpush.bf16.msra.mxu0 %v1693
    %2213 = vmatmul.bf16.gmra.mxu0 %v651
    %v2214 = vpop.f32.mrf.mxu0
    %v2215 = vadd.f32 %v917, %v2214
    %v2216 = vpop.f32.mrf.mxu0
    %2217 = vdwg.mxu0
    %2218 = vmatpush.bf16.msra.mxu0 %v1753
    %2219 = vmatpush.bf16.msra.mxu0 %v1749
    %2220 = vmatpush.bf16.msra.mxu0 %v1745
    %2221 = vmatpush.bf16.msra.mxu0 %v1741
    %2222 = vmatpush.bf16.msra.mxu0 %v1737
    %2223 = vmatpush.bf16.msra.mxu0 %v1733
    %2224 = vmatpush.bf16.msra.mxu0 %v1729
    %2225 = vmatpush.bf16.msra.mxu0 %v1725
    %2226 = vmatmul.bf16.gmra.mxu0 %v652
    %v2227 = vpop.f32.mrf.mxu0
    %v2228 = vadd.f32 %v2215, %v2227
    %v2229 = vpop.f32.mrf.mxu0
    %2230 = vdwg.mxu0
    %2231 = vmatpush.bf16.msra.mxu0 %v1785
    %2232 = vmatpush.bf16.msra.mxu0 %v1781
    %2233 = vmatpush.bf16.msra.mxu0 %v1777
    %2234 = vmatpush.bf16.msra.mxu0 %v1773
    %2235 = vmatpush.bf16.msra.mxu0 %v1769
    %2236 = vmatpush.bf16.msra.mxu0 %v1765
    %2237 = vmatpush.bf16.msra.mxu0 %v1761
    %2238 = vmatpush.bf16.msra.mxu0 %v1757
    %2239 = vmatmul.bf16.gmra.mxu0 %v653
    %v2240 = vpop.f32.mrf.mxu0
    %v2241 = vadd.f32 %v2228, %v2240
    %v2242 = vpop.f32.mrf.mxu0
    %2243 = vdwg.mxu0
    %2244 = vmatpush.bf16.msra.mxu0 %v1817
    %2245 = vmatpush.bf16.msra.mxu0 %v1813
    %2246 = vmatpush.bf16.msra.mxu0 %v1809
    %2247 = vmatpush.bf16.msra.mxu0 %v1805
    %2248 = vmatpush.bf16.msra.mxu0 %v1801
    %2249 = vmatpush.bf16.msra.mxu0 %v1797
    %2250 = vmatpush.bf16.msra.mxu0 %v1793
    %2251 = vmatpush.bf16.msra.mxu0 %v1789
    %2252 = vmatmul.bf16.gmra.mxu0 %v654
    %v2253 = vpop.f32.mrf.mxu0
    %v2254 = vadd.f32 %v2241, %v2253
    %v2255 = vpop.f32.mrf.mxu0
    %2256 = vdwg.mxu0
    %2257 = vmatpush.bf16.msra.mxu0 %v1849
    %2258 = vmatpush.bf16.msra.mxu0 %v1845
    %2259 = vmatpush.bf16.msra.mxu0 %v1841
    %2260 = vmatpush.bf16.msra.mxu0 %v1837
    %2261 = vmatpush.bf16.msra.mxu0 %v1833
    %2262 = vmatpush.bf16.msra.mxu0 %v1829
    %2263 = vmatpush.bf16.msra.mxu0 %v1825
    %2264 = vmatpush.bf16.msra.mxu0 %v1821
    %2265 = vmatmul.bf16.gmra.mxu0 %v655
    %v2266 = vpop.f32.mrf.mxu0
    %v2267 = vadd.f32 %v2254, %v2266
    %v2268 = vpop.f32.mrf.mxu0
    %2269 = vdwg.mxu0
    %2270 = vmatpush.bf16.msra.mxu0 %v1881
    %2271 = vmatpush.bf16.msra.mxu0 %v1877
    %2272 = vmatpush.bf16.msra.mxu0 %v1873
    %2273 = vmatpush.bf16.msra.mxu0 %v1869
    %2274 = vmatpush.bf16.msra.mxu0 %v1865
    %2275 = vmatpush.bf16.msra.mxu0 %v1861
    %2276 = vmatpush.bf16.msra.mxu0 %v1857
    %2277 = vmatpush.bf16.msra.mxu0 %v1853
    %2278 = vmatmul.bf16.gmra.mxu0 %v656
    %v2279 = vpop.f32.mrf.mxu0
    %v2280 = vadd.f32 %v2267, %v2279
    %v2281 = vpop.f32.mrf.mxu0
    %2282 = vdwg.mxu0
    %2283 = vmatpush.bf16.msra.mxu0 %v1913
    %2284 = vmatpush.bf16.msra.mxu0 %v1909
    %2285 = vmatpush.bf16.msra.mxu0 %v1905
    %2286 = vmatpush.bf16.msra.mxu0 %v1901
    %2287 = vmatpush.bf16.msra.mxu0 %v1897
    %2288 = vmatpush.bf16.msra.mxu0 %v1893
    %2289 = vmatpush.bf16.msra.mxu0 %v1889
    %2290 = vmatpush.bf16.msra.mxu0 %v1885
    %2291 = vmatmul.bf16.gmra.mxu0 %v657
    %v2292 = vpop.f32.mrf.mxu0
    %v2293 = vadd.f32 %v2280, %v2292
    %v2294 = vpop.f32.mrf.mxu0
    %2295 = vdwg.mxu0
    %2296 = vmatpush.bf16.msra.mxu0 %v1945
    %2297 = vmatpush.bf16.msra.mxu0 %v1941
    %2298 = vmatpush.bf16.msra.mxu0 %v1937
    %2299 = vmatpush.bf16.msra.mxu0 %v1933
    %2300 = vmatpush.bf16.msra.mxu0 %v1929
    %2301 = vmatpush.bf16.msra.mxu0 %v1925
    %2302 = vmatpush.bf16.msra.mxu0 %v1921
    %2303 = vmatpush.bf16.msra.mxu0 %v1917
    %2304 = vmatmul.bf16.gmra.mxu0 %v658
    %v2305 = vpop.f32.mrf.mxu0
    %v2306 = vadd.f32 %v2293, %v2305
    %v2307 = vpop.f32.mrf.mxu0
    %2308 = vdwg.mxu0
    %2309 = vmatpush.bf16.msra.mxu0 %v1722
    %2310 = vmatpush.bf16.msra.mxu0 %v1718
    %2311 = vmatpush.bf16.msra.mxu0 %v1714
    %2312 = vmatpush.bf16.msra.mxu0 %v1710
    %2313 = vmatpush.bf16.msra.mxu0 %v1706
    %2314 = vmatpush.bf16.msra.mxu0 %v1702
    %2315 = vmatpush.bf16.msra.mxu0 %v1698
    %2316 = vmatpush.bf16.msra.mxu0 %v1694
    %2317 = vmatmul.bf16.gmra.mxu0 %v651
    %v2318 = vpop.f32.mrf.mxu0
    %v2319 = vadd.f32 %v918, %v2318
    %v2320 = vpop.f32.mrf.mxu0
    %2321 = vdwg.mxu0
    %2322 = vmatpush.bf16.msra.mxu0 %v1754
    %2323 = vmatpush.bf16.msra.mxu0 %v1750
    %2324 = vmatpush.bf16.msra.mxu0 %v1746
    %2325 = vmatpush.bf16.msra.mxu0 %v1742
    %2326 = vmatpush.bf16.msra.mxu0 %v1738
    %2327 = vmatpush.bf16.msra.mxu0 %v1734
    %2328 = vmatpush.bf16.msra.mxu0 %v1730
    %2329 = vmatpush.bf16.msra.mxu0 %v1726
    %2330 = vmatmul.bf16.gmra.mxu0 %v652
    %v2331 = vpop.f32.mrf.mxu0
    %v2332 = vadd.f32 %v2319, %v2331
    %v2333 = vpop.f32.mrf.mxu0
    %2334 = vdwg.mxu0
    %2335 = vmatpush.bf16.msra.mxu0 %v1786
    %2336 = vmatpush.bf16.msra.mxu0 %v1782
    %2337 = vmatpush.bf16.msra.mxu0 %v1778
    %2338 = vmatpush.bf16.msra.mxu0 %v1774
    %2339 = vmatpush.bf16.msra.mxu0 %v1770
    %2340 = vmatpush.bf16.msra.mxu0 %v1766
    %2341 = vmatpush.bf16.msra.mxu0 %v1762
    %2342 = vmatpush.bf16.msra.mxu0 %v1758
    %2343 = vmatmul.bf16.gmra.mxu0 %v653
    %v2344 = vpop.f32.mrf.mxu0
    %v2345 = vadd.f32 %v2332, %v2344
    %v2346 = vpop.f32.mrf.mxu0
    %2347 = vdwg.mxu0
    %2348 = vmatpush.bf16.msra.mxu0 %v1818
    %2349 = vmatpush.bf16.msra.mxu0 %v1814
    %2350 = vmatpush.bf16.msra.mxu0 %v1810
    %2351 = vmatpush.bf16.msra.mxu0 %v1806
    %2352 = vmatpush.bf16.msra.mxu0 %v1802
    %2353 = vmatpush.bf16.msra.mxu0 %v1798
    %2354 = vmatpush.bf16.msra.mxu0 %v1794
    %2355 = vmatpush.bf16.msra.mxu0 %v1790
    %2356 = vmatmul.bf16.gmra.mxu0 %v654
    %v2357 = vpop.f32.mrf.mxu0
    %v2358 = vadd.f32 %v2345, %v2357
    %v2359 = vpop.f32.mrf.mxu0
    %2360 = vdwg.mxu0
    %2361 = vmatpush.bf16.msra.mxu0 %v1850
    %2362 = vmatpush.bf16.msra.mxu0 %v1846
    %2363 = vmatpush.bf16.msra.mxu0 %v1842
    %2364 = vmatpush.bf16.msra.mxu0 %v1838
    %2365 = vmatpush.bf16.msra.mxu0 %v1834
    %2366 = vmatpush.bf16.msra.mxu0 %v1830
    %2367 = vmatpush.bf16.msra.mxu0 %v1826
    %2368 = vmatpush.bf16.msra.mxu0 %v1822
    %2369 = vmatmul.bf16.gmra.mxu0 %v655
    %v2370 = vpop.f32.mrf.mxu0
    %v2371 = vadd.f32 %v2358, %v2370
    %v2372 = vpop.f32.mrf.mxu0
    %2373 = vdwg.mxu0
    %2374 = vmatpush.bf16.msra.mxu0 %v1882
    %2375 = vmatpush.bf16.msra.mxu0 %v1878
    %2376 = vmatpush.bf16.msra.mxu0 %v1874
    %2377 = vmatpush.bf16.msra.mxu0 %v1870
    %2378 = vmatpush.bf16.msra.mxu0 %v1866
    %2379 = vmatpush.bf16.msra.mxu0 %v1862
    %2380 = vmatpush.bf16.msra.mxu0 %v1858
    %2381 = vmatpush.bf16.msra.mxu0 %v1854
    %2382 = vmatmul.bf16.gmra.mxu0 %v656
    %v2383 = vpop.f32.mrf.mxu0
    %v2384 = vadd.f32 %v2371, %v2383
    %v2385 = vpop.f32.mrf.mxu0
    %2386 = vdwg.mxu0
    %2387 = vmatpush.bf16.msra.mxu0 %v1914
    %2388 = vmatpush.bf16.msra.mxu0 %v1910
    %2389 = vmatpush.bf16.msra.mxu0 %v1906
    %2390 = vmatpush.bf16.msra.mxu0 %v1902
    %2391 = vmatpush.bf16.msra.mxu0 %v1898
    %2392 = vmatpush.bf16.msra.mxu0 %v1894
    %2393 = vmatpush.bf16.msra.mxu0 %v1890
    %2394 = vmatpush.bf16.msra.mxu0 %v1886
    %2395 = vmatmul.bf16.gmra.mxu0 %v657
    %v2396 = vpop.f32.mrf.mxu0
    %v2397 = vadd.f32 %v2384, %v2396
    %v2398 = vpop.f32.mrf.mxu0
    %2399 = vdwg.mxu0
    %2400 = vmatpush.bf16.msra.mxu0 %v1946
    %2401 = vmatpush.bf16.msra.mxu0 %v1942
    %2402 = vmatpush.bf16.msra.mxu0 %v1938
    %2403 = vmatpush.bf16.msra.mxu0 %v1934
    %2404 = vmatpush.bf16.msra.mxu0 %v1930
    %2405 = vmatpush.bf16.msra.mxu0 %v1926
    %2406 = vmatpush.bf16.msra.mxu0 %v1922
    %2407 = vmatpush.bf16.msra.mxu0 %v1918
    %2408 = vmatmul.bf16.gmra.mxu0 %v658
    %v2409 = vpop.f32.mrf.mxu0
    %v2410 = vadd.f32 %v2397, %v2409
    %v2411 = vpop.f32.mrf.mxu0
    %2412 = vdwg.mxu0
    %2413 = vmatpush.bf16.msra.mxu0 %v1723
    %2414 = vmatpush.bf16.msra.mxu0 %v1719
    %2415 = vmatpush.bf16.msra.mxu0 %v1715
    %2416 = vmatpush.bf16.msra.mxu0 %v1711
    %2417 = vmatpush.bf16.msra.mxu0 %v1707
    %2418 = vmatpush.bf16.msra.mxu0 %v1703
    %2419 = vmatpush.bf16.msra.mxu0 %v1699
    %2420 = vmatpush.bf16.msra.mxu0 %v1695
    %2421 = vmatmul.bf16.gmra.mxu0 %v651
    %v2422 = vpop.f32.mrf.mxu0
    %v2423 = vadd.f32 %v919, %v2422
    %v2424 = vpop.f32.mrf.mxu0
    %2425 = vdwg.mxu0
    %2426 = vmatpush.bf16.msra.mxu0 %v1755
    %2427 = vmatpush.bf16.msra.mxu0 %v1751
    %2428 = vmatpush.bf16.msra.mxu0 %v1747
    %2429 = vmatpush.bf16.msra.mxu0 %v1743
    %2430 = vmatpush.bf16.msra.mxu0 %v1739
    %2431 = vmatpush.bf16.msra.mxu0 %v1735
    %2432 = vmatpush.bf16.msra.mxu0 %v1731
    %2433 = vmatpush.bf16.msra.mxu0 %v1727
    %2434 = vmatmul.bf16.gmra.mxu0 %v652
    %v2435 = vpop.f32.mrf.mxu0
    %v2436 = vadd.f32 %v2423, %v2435
    %v2437 = vpop.f32.mrf.mxu0
    %2438 = vdwg.mxu0
    %2439 = vmatpush.bf16.msra.mxu0 %v1787
    %2440 = vmatpush.bf16.msra.mxu0 %v1783
    %2441 = vmatpush.bf16.msra.mxu0 %v1779
    %2442 = vmatpush.bf16.msra.mxu0 %v1775
    %2443 = vmatpush.bf16.msra.mxu0 %v1771
    %2444 = vmatpush.bf16.msra.mxu0 %v1767
    %2445 = vmatpush.bf16.msra.mxu0 %v1763
    %2446 = vmatpush.bf16.msra.mxu0 %v1759
    %2447 = vmatmul.bf16.gmra.mxu0 %v653
    %v2448 = vpop.f32.mrf.mxu0
    %v2449 = vadd.f32 %v2436, %v2448
    %v2450 = vpop.f32.mrf.mxu0
    %2451 = vdwg.mxu0
    %2452 = vmatpush.bf16.msra.mxu0 %v1819
    %2453 = vmatpush.bf16.msra.mxu0 %v1815
    %2454 = vmatpush.bf16.msra.mxu0 %v1811
    %2455 = vmatpush.bf16.msra.mxu0 %v1807
    %2456 = vmatpush.bf16.msra.mxu0 %v1803
    %2457 = vmatpush.bf16.msra.mxu0 %v1799
    %2458 = vmatpush.bf16.msra.mxu0 %v1795
    %2459 = vmatpush.bf16.msra.mxu0 %v1791
    %2460 = vmatmul.bf16.gmra.mxu0 %v654
    %v2461 = vpop.f32.mrf.mxu0
    %v2462 = vadd.f32 %v2449, %v2461
    %v2463 = vpop.f32.mrf.mxu0
    %2464 = vdwg.mxu0
    %2465 = vmatpush.bf16.msra.mxu0 %v1851
    %2466 = vmatpush.bf16.msra.mxu0 %v1847
    %2467 = vmatpush.bf16.msra.mxu0 %v1843
    %2468 = vmatpush.bf16.msra.mxu0 %v1839
    %2469 = vmatpush.bf16.msra.mxu0 %v1835
    %2470 = vmatpush.bf16.msra.mxu0 %v1831
    %2471 = vmatpush.bf16.msra.mxu0 %v1827
    %2472 = vmatpush.bf16.msra.mxu0 %v1823
    %2473 = vmatmul.bf16.gmra.mxu0 %v655
    %v2474 = vpop.f32.mrf.mxu0
    %v2475 = vadd.f32 %v2462, %v2474
    %v2476 = vpop.f32.mrf.mxu0
    %2477 = vdwg.mxu0
    %2478 = vmatpush.bf16.msra.mxu0 %v1883
    %2479 = vmatpush.bf16.msra.mxu0 %v1879
    %2480 = vmatpush.bf16.msra.mxu0 %v1875
    %2481 = vmatpush.bf16.msra.mxu0 %v1871
    %2482 = vmatpush.bf16.msra.mxu0 %v1867
    %2483 = vmatpush.bf16.msra.mxu0 %v1863
    %2484 = vmatpush.bf16.msra.mxu0 %v1859
    %2485 = vmatpush.bf16.msra.mxu0 %v1855
    %2486 = vmatmul.bf16.gmra.mxu0 %v656
    %v2487 = vpop.f32.mrf.mxu0
    %v2488 = vadd.f32 %v2475, %v2487
    %v2489 = vpop.f32.mrf.mxu0
    %2490 = vdwg.mxu0
    %2491 = vmatpush.bf16.msra.mxu0 %v1915
    %2492 = vmatpush.bf16.msra.mxu0 %v1911
    %2493 = vmatpush.bf16.msra.mxu0 %v1907
    %2494 = vmatpush.bf16.msra.mxu0 %v1903
    %2495 = vmatpush.bf16.msra.mxu0 %v1899
    %2496 = vmatpush.bf16.msra.mxu0 %v1895
    %2497 = vmatpush.bf16.msra.mxu0 %v1891
    %2498 = vmatpush.bf16.msra.mxu0 %v1887
    %2499 = vmatmul.bf16.gmra.mxu0 %v657
    %v2500 = vpop.f32.mrf.mxu0
    %v2501 = vadd.f32 %v2488, %v2500
    %v2502 = vpop.f32.mrf.mxu0
    %2503 = vdwg.mxu0
    %2504 = vmatpush.bf16.msra.mxu0 %v1947
    %2505 = vmatpush.bf16.msra.mxu0 %v1943
    %2506 = vmatpush.bf16.msra.mxu0 %v1939
    %2507 = vmatpush.bf16.msra.mxu0 %v1935
    %2508 = vmatpush.bf16.msra.mxu0 %v1931
    %2509 = vmatpush.bf16.msra.mxu0 %v1927
    %2510 = vmatpush.bf16.msra.mxu0 %v1923
    %2511 = vmatpush.bf16.msra.mxu0 %v1919
    %2512 = vmatmul.bf16.gmra.mxu0 %v658
    %v2513 = vpop.f32.mrf.mxu0
    %v2514 = vadd.f32 %v2501, %v2513
    %v2515 = vpop.f32.mrf.mxu0
    %2516 = vdwg.mxu0
    %2517 = vmatpush.bf16.msra.mxu0 %v1724
    %2518 = vmatpush.bf16.msra.mxu0 %v1720
    %2519 = vmatpush.bf16.msra.mxu0 %v1716
    %2520 = vmatpush.bf16.msra.mxu0 %v1712
    %2521 = vmatpush.bf16.msra.mxu0 %v1708
    %2522 = vmatpush.bf16.msra.mxu0 %v1704
    %2523 = vmatpush.bf16.msra.mxu0 %v1700
    %2524 = vmatpush.bf16.msra.mxu0 %v1696
    %2525 = vmatmul.bf16.gmra.mxu0 %v651
    %v2526 = vpop.f32.mrf.mxu0
    %v2527 = vadd.f32 %v920, %v2526
    %v2528 = vpop.f32.mrf.mxu0
    %2529 = vdwg.mxu0
    %2530 = vmatpush.bf16.msra.mxu0 %v1756
    %2531 = vmatpush.bf16.msra.mxu0 %v1752
    %2532 = vmatpush.bf16.msra.mxu0 %v1748
    %2533 = vmatpush.bf16.msra.mxu0 %v1744
    %2534 = vmatpush.bf16.msra.mxu0 %v1740
    %2535 = vmatpush.bf16.msra.mxu0 %v1736
    %2536 = vmatpush.bf16.msra.mxu0 %v1732
    %2537 = vmatpush.bf16.msra.mxu0 %v1728
    %2538 = vmatmul.bf16.gmra.mxu0 %v652
    %v2539 = vpop.f32.mrf.mxu0
    %v2540 = vadd.f32 %v2527, %v2539
    %v2541 = vpop.f32.mrf.mxu0
    %2542 = vdwg.mxu0
    %2543 = vmatpush.bf16.msra.mxu0 %v1788
    %2544 = vmatpush.bf16.msra.mxu0 %v1784
    %2545 = vmatpush.bf16.msra.mxu0 %v1780
    %2546 = vmatpush.bf16.msra.mxu0 %v1776
    %2547 = vmatpush.bf16.msra.mxu0 %v1772
    %2548 = vmatpush.bf16.msra.mxu0 %v1768
    %2549 = vmatpush.bf16.msra.mxu0 %v1764
    %2550 = vmatpush.bf16.msra.mxu0 %v1760
    %2551 = vmatmul.bf16.gmra.mxu0 %v653
    %v2552 = vpop.f32.mrf.mxu0
    %v2553 = vadd.f32 %v2540, %v2552
    %v2554 = vpop.f32.mrf.mxu0
    %2555 = vdwg.mxu0
    %2556 = vmatpush.bf16.msra.mxu0 %v1820
    %2557 = vmatpush.bf16.msra.mxu0 %v1816
    %2558 = vmatpush.bf16.msra.mxu0 %v1812
    %2559 = vmatpush.bf16.msra.mxu0 %v1808
    %2560 = vmatpush.bf16.msra.mxu0 %v1804
    %2561 = vmatpush.bf16.msra.mxu0 %v1800
    %2562 = vmatpush.bf16.msra.mxu0 %v1796
    %2563 = vmatpush.bf16.msra.mxu0 %v1792
    %2564 = vmatmul.bf16.gmra.mxu0 %v654
    %v2565 = vpop.f32.mrf.mxu0
    %v2566 = vadd.f32 %v2553, %v2565
    %v2567 = vpop.f32.mrf.mxu0
    %2568 = vdwg.mxu0
    %2569 = vmatpush.bf16.msra.mxu0 %v1852
    %2570 = vmatpush.bf16.msra.mxu0 %v1848
    %2571 = vmatpush.bf16.msra.mxu0 %v1844
    %2572 = vmatpush.bf16.msra.mxu0 %v1840
    %2573 = vmatpush.bf16.msra.mxu0 %v1836
    %2574 = vmatpush.bf16.msra.mxu0 %v1832
    %2575 = vmatpush.bf16.msra.mxu0 %v1828
    %2576 = vmatpush.bf16.msra.mxu0 %v1824
    %2577 = vmatmul.bf16.gmra.mxu0 %v655
    %v2578 = vpop.f32.mrf.mxu0
    %v2579 = vadd.f32 %v2566, %v2578
    %v2580 = vpop.f32.mrf.mxu0
    %2581 = vdwg.mxu0
    %2582 = vmatpush.bf16.msra.mxu0 %v1884
    %2583 = vmatpush.bf16.msra.mxu0 %v1880
    %2584 = vmatpush.bf16.msra.mxu0 %v1876
    %2585 = vmatpush.bf16.msra.mxu0 %v1872
    %2586 = vmatpush.bf16.msra.mxu0 %v1868
    %2587 = vmatpush.bf16.msra.mxu0 %v1864
    %2588 = vmatpush.bf16.msra.mxu0 %v1860
    %2589 = vmatpush.bf16.msra.mxu0 %v1856
    %2590 = vmatmul.bf16.gmra.mxu0 %v656
    %v2591 = vpop.f32.mrf.mxu0
    %v2592 = vadd.f32 %v2579, %v2591
    %v2593 = vpop.f32.mrf.mxu0
    %2594 = vdwg.mxu0
    %2595 = vmatpush.bf16.msra.mxu0 %v1916
    %2596 = vmatpush.bf16.msra.mxu0 %v1912
    %2597 = vmatpush.bf16.msra.mxu0 %v1908
    %2598 = vmatpush.bf16.msra.mxu0 %v1904
    %2599 = vmatpush.bf16.msra.mxu0 %v1900
    %2600 = vmatpush.bf16.msra.mxu0 %v1896
    %2601 = vmatpush.bf16.msra.mxu0 %v1892
    %2602 = vmatpush.bf16.msra.mxu0 %v1888
    %2603 = vmatmul.bf16.gmra.mxu0 %v657
    %v2604 = vpop.f32.mrf.mxu0
    %v2605 = vadd.f32 %v2592, %v2604
    %v2606 = vpop.f32.mrf.mxu0
    %2607 = vdwg.mxu0
    %2608 = vmatpush.bf16.msra.mxu0 %v1948
    %2609 = vmatpush.bf16.msra.mxu0 %v1944
    %2610 = vmatpush.bf16.msra.mxu0 %v1940
    %2611 = vmatpush.bf16.msra.mxu0 %v1936
    %2612 = vmatpush.bf16.msra.mxu0 %v1932
    %2613 = vmatpush.bf16.msra.mxu0 %v1928
    %2614 = vmatpush.bf16.msra.mxu0 %v1924
    %2615 = vmatpush.bf16.msra.mxu0 %v1920
    %2616 = vmatmul.bf16.gmra.mxu0 %v658
    %v2617 = vpop.f32.mrf.mxu0
    %v2618 = vadd.f32 %v2605, %v2617
    %v2619 = vpop.f32.mrf.mxu0
    %2620 = vdwg.mxu0
    %v2621 = vmax.f32 %v2306, 0.0
    %v2622 = vmax.f32 %v2410, 0.0
    %v2623 = vmax.f32 %v2514, 0.0
    %v2624 = vmax.f32 %v2618, 0.0
    %v2625 = vpack.c.bf16 %v2621, %v2621
    %v2626 = vpack.c.bf16 %v2622, %v2622
    %v2627 = vpack.c.bf16 %v2623, %v2623
    %v2628 = vpack.c.bf16 %v2624, %v2624
    %v2629 = vld [vmem:[#allocation11] sm:$0xf]
    %v2630 = vld [vmem:[#allocation11 + $0x4] sm:$0xf]
    %v2631 = vld [vmem:[#allocation11 + $0x8] sm:$0xf]
    %v2632 = vld [vmem:[#allocation11 + $0xc] sm:$0xf]
    %v2633 = vld [vmem:[#allocation11 + $0x10] sm:$0xf]
    %v2634 = vld [vmem:[#allocation11 + $0x14] sm:$0xf]
    %v2635 = vld [vmem:[#allocation11 + $0x18] sm:$0xf]
    %v2636 = vld [vmem:[#allocation11 + $0x1c] sm:$0xf]
    %v2637 = vld [vmem:[#allocation11 + $0x20] sm:$0xf]
    %v2638 = vld [vmem:[#allocation11 + $0x24] sm:$0xf]
    %v2639 = vld [vmem:[#allocation11 + $0x28] sm:$0xf]
    %v2640 = vld [vmem:[#allocation11 + $0x2c] sm:$0xf]
    %v2641 = vld [vmem:[#allocation11 + $0x30] sm:$0xf]
    %v2642 = vld [vmem:[#allocation11 + $0x34] sm:$0xf]
    %v2643 = vld [vmem:[#allocation11 + $0x38] sm:$0xf]
    %v2644 = vld [vmem:[#allocation11 + $0x3c] sm:$0xf]
    %v2645 = vld [vmem:[#allocation11 + $0x40] sm:$0xf]
    %v2646 = vld [vmem:[#allocation11 + $0x44] sm:$0xf]
    %v2647 = vld [vmem:[#allocation11 + $0x48] sm:$0xf]
    %v2648 = vld [vmem:[#allocation11 + $0x4c] sm:$0xf]
    %v2649 = vld [vmem:[#allocation11 + $0x50] sm:$0xf]
    %v2650 = vld [vmem:[#allocation11 + $0x54] sm:$0xf]
    %v2651 = vld [vmem:[#allocation11 + $0x58] sm:$0xf]
    %v2652 = vld [vmem:[#allocation11 + $0x5c] sm:$0xf]
    %v2653 = vld [vmem:[#allocation11 + $0x60] sm:$0xf]
    %v2654 = vld [vmem:[#allocation11 + $0x64] sm:$0xf]
    %v2655 = vld [vmem:[#allocation11 + $0x68] sm:$0xf]
    %v2656 = vld [vmem:[#allocation11 + $0x6c] sm:$0xf]
    %v2657 = vld [vmem:[#allocation11 + $0x70] sm:$0xf]
    %v2658 = vld [vmem:[#allocation11 + $0x74] sm:$0xf]
    %v2659 = vld [vmem:[#allocation11 + $0x78] sm:$0xf]
    %v2660 = vld [vmem:[#allocation11 + $0x7c] sm:$0xf]
    %v2661 = vld [vmem:[#allocation11 + $0x80] sm:$0xf]
    %v2662 = vld [vmem:[#allocation11 + $0x84] sm:$0xf]
    %v2663 = vld [vmem:[#allocation11 + $0x88] sm:$0xf]
    %v2664 = vld [vmem:[#allocation11 + $0x8c] sm:$0xf]
    %v2665 = vld [vmem:[#allocation11 + $0x90] sm:$0xf]
    %v2666 = vld [vmem:[#allocation11 + $0x94] sm:$0xf]
    %v2667 = vld [vmem:[#allocation11 + $0x98] sm:$0xf]
    %v2668 = vld [vmem:[#allocation11 + $0x9c] sm:$0xf]
    %v2669 = vld [vmem:[#allocation11 + $0xa0] sm:$0xf]
    %v2670 = vld [vmem:[#allocation11 + $0xa4] sm:$0xf]
    %v2671 = vld [vmem:[#allocation11 + $0xa8] sm:$0xf]
    %v2672 = vld [vmem:[#allocation11 + $0xac] sm:$0xf]
    %v2673 = vld [vmem:[#allocation11 + $0xb0] sm:$0xf]
    %v2674 = vld [vmem:[#allocation11 + $0xb4] sm:$0xf]
    %v2675 = vld [vmem:[#allocation11 + $0xb8] sm:$0xf]
    %v2676 = vld [vmem:[#allocation11 + $0xbc] sm:$0xf]
    %v2677 = vld [vmem:[#allocation11 + $0xc0] sm:$0xf]
    %v2678 = vld [vmem:[#allocation11 + $0xc4] sm:$0xf]
    %v2679 = vld [vmem:[#allocation11 + $0xc8] sm:$0xf]
    %v2680 = vld [vmem:[#allocation11 + $0xcc] sm:$0xf]
    %v2681 = vld [vmem:[#allocation11 + $0xd0] sm:$0xf]
    %v2682 = vld [vmem:[#allocation11 + $0xd4] sm:$0xf]
    %v2683 = vld [vmem:[#allocation11 + $0xd8] sm:$0xf]
    %v2684 = vld [vmem:[#allocation11 + $0xdc] sm:$0xf]
    %v2685 = vld [vmem:[#allocation11 + $0xe0] sm:$0xf]
    %v2686 = vld [vmem:[#allocation11 + $0xe4] sm:$0xf]
    %v2687 = vld [vmem:[#allocation11 + $0xe8] sm:$0xf]
    %v2688 = vld [vmem:[#allocation11 + $0xec] sm:$0xf]
    %v2689 = vld [vmem:[#allocation11 + $0xf0] sm:$0xf]
    %v2690 = vld [vmem:[#allocation11 + $0xf4] sm:$0xf]
    %v2691 = vld [vmem:[#allocation11 + $0xf8] sm:$0xf]
    %v2692 = vld [vmem:[#allocation11 + $0xfc] sm:$0xf]
    %v2693 = vld [vmem:[%s6] sm:$0x1]
    %v2695 = vperm.slane %v2693, 0
    %v2761 = vunpack.c.l.b16 %v2629
    %v2762 = vunpack.c.l.b16 %v2630
    %v2763 = vunpack.c.l.b16 %v2631
    %v2764 = vunpack.c.l.b16 %v2632
    %v2765 = vunpack.c.l.b16 %v2633
    %v2766 = vunpack.c.l.b16 %v2634
    %v2767 = vunpack.c.l.b16 %v2635
    %v2768 = vunpack.c.l.b16 %v2636
    %v2769 = vunpack.c.l.b16 %v2637
    %v2770 = vunpack.c.l.b16 %v2638
    %v2771 = vunpack.c.l.b16 %v2639
    %v2772 = vunpack.c.l.b16 %v2640
    %v2773 = vunpack.c.l.b16 %v2641
    %v2774 = vunpack.c.l.b16 %v2642
    %v2775 = vunpack.c.l.b16 %v2643
    %v2776 = vunpack.c.l.b16 %v2644
    %v2777 = vunpack.c.l.b16 %v2645
    %v2778 = vunpack.c.l.b16 %v2646
    %v2779 = vunpack.c.l.b16 %v2647
    %v2780 = vunpack.c.l.b16 %v2648
    %v2781 = vunpack.c.l.b16 %v2649
    %v2782 = vunpack.c.l.b16 %v2650
    %v2783 = vunpack.c.l.b16 %v2651
    %v2784 = vunpack.c.l.b16 %v2652
    %v2785 = vunpack.c.l.b16 %v2653
    %v2786 = vunpack.c.l.b16 %v2654
    %v2787 = vunpack.c.l.b16 %v2655
    %v2788 = vunpack.c.l.b16 %v2656
    %v2789 = vunpack.c.l.b16 %v2657
    %v2790 = vunpack.c.l.b16 %v2658
    %v2791 = vunpack.c.l.b16 %v2659
    %v2792 = vunpack.c.l.b16 %v2660
    %v2793 = vunpack.c.l.b16 %v2661
    %v2794 = vunpack.c.l.b16 %v2662
    %v2795 = vunpack.c.l.b16 %v2663
    %v2796 = vunpack.c.l.b16 %v2664
    %v2797 = vunpack.c.l.b16 %v2665
    %v2798 = vunpack.c.l.b16 %v2666
    %v2799 = vunpack.c.l.b16 %v2667
    %v2800 = vunpack.c.l.b16 %v2668
    %v2801 = vunpack.c.l.b16 %v2669
    %v2802 = vunpack.c.l.b16 %v2670
    %v2803 = vunpack.c.l.b16 %v2671
    %v2804 = vunpack.c.l.b16 %v2672
    %v2805 = vunpack.c.l.b16 %v2673
    %v2806 = vunpack.c.l.b16 %v2674
    %v2807 = vunpack.c.l.b16 %v2675
    %v2808 = vunpack.c.l.b16 %v2676
    %v2809 = vunpack.c.l.b16 %v2677
    %v2810 = vunpack.c.l.b16 %v2678
    %v2811 = vunpack.c.l.b16 %v2679
    %v2812 = vunpack.c.l.b16 %v2680
    %v2813 = vunpack.c.l.b16 %v2681
    %v2814 = vunpack.c.l.b16 %v2682
    %v2815 = vunpack.c.l.b16 %v2683
    %v2816 = vunpack.c.l.b16 %v2684
    %v2817 = vunpack.c.l.b16 %v2685
    %v2818 = vunpack.c.l.b16 %v2686
    %v2819 = vunpack.c.l.b16 %v2687
    %v2820 = vunpack.c.l.b16 %v2688
    %v2821 = vunpack.c.l.b16 %v2689
    %v2822 = vunpack.c.l.b16 %v2690
    %v2823 = vunpack.c.l.b16 %v2691
    %v2824 = vunpack.c.l.b16 %v2692
    %v2825 = vpack.c.b16 %v2762, %v2761
    %v2826 = vpack.c.b16 %v2764, %v2763
    %v2827 = vpack.c.b16 %v2766, %v2765
    %v2828 = vpack.c.b16 %v2768, %v2767
    %v2829 = vpack.c.b16 %v2770, %v2769
    %v2830 = vpack.c.b16 %v2772, %v2771
    %v2831 = vpack.c.b16 %v2774, %v2773
    %v2832 = vpack.c.b16 %v2776, %v2775
    %v2833 = vpack.c.b16 %v2778, %v2777
    %v2834 = vpack.c.b16 %v2780, %v2779
    %v2835 = vpack.c.b16 %v2782, %v2781
    %v2836 = vpack.c.b16 %v2784, %v2783
    %v2837 = vpack.c.b16 %v2786, %v2785
    %v2838 = vpack.c.b16 %v2788, %v2787
    %v2839 = vpack.c.b16 %v2790, %v2789
    %v2840 = vpack.c.b16 %v2792, %v2791
    %v2841 = vpack.c.b16 %v2794, %v2793
    %v2842 = vpack.c.b16 %v2796, %v2795
    %v2843 = vpack.c.b16 %v2798, %v2797
    %v2844 = vpack.c.b16 %v2800, %v2799
    %v2845 = vpack.c.b16 %v2802, %v2801
    %v2846 = vpack.c.b16 %v2804, %v2803
    %v2847 = vpack.c.b16 %v2806, %v2805
    %v2848 = vpack.c.b16 %v2808, %v2807
    %v2849 = vpack.c.b16 %v2810, %v2809
    %v2850 = vpack.c.b16 %v2812, %v2811
    %v2851 = vpack.c.b16 %v2814, %v2813
    %v2852 = vpack.c.b16 %v2816, %v2815
    %v2853 = vpack.c.b16 %v2818, %v2817
    %v2854 = vpack.c.b16 %v2820, %v2819
    %v2855 = vpack.c.b16 %v2822, %v2821
    %v2856 = vpack.c.b16 %v2824, %v2823
    %2889 = vmatpush.bf16.msra.mxu0 %v2832
    %2890 = vmatpush.bf16.msra.mxu0 %v2831
    %2891 = vmatpush.bf16.msra.mxu0 %v2830
    %2892 = vmatpush.bf16.msra.mxu0 %v2829
    %2893 = vmatpush.bf16.msra.mxu0 %v2828
    %2894 = vmatpush.bf16.msra.mxu0 %v2827
    %2895 = vmatpush.bf16.msra.mxu0 %v2826
    %2896 = vmatpush.bf16.msra.mxu0 %v2825
    %2897 = vmatmul.bf16.gmra.mxu0 %v2625
    %v2898 = vpop.f32.mrf.mxu0
    %v2899 = vadd.f32 %v2695, %v2898
    %v2900 = vpop.f32.mrf.mxu0
    %2901 = vdwg.mxu0
    %2902 = vmatpush.bf16.msra.mxu0 %v2840
    %2903 = vmatpush.bf16.msra.mxu0 %v2839
    %2904 = vmatpush.bf16.msra.mxu0 %v2838
    %2905 = vmatpush.bf16.msra.mxu0 %v2837
    %2906 = vmatpush.bf16.msra.mxu0 %v2836
    %2907 = vmatpush.bf16.msra.mxu0 %v2835
    %2908 = vmatpush.bf16.msra.mxu0 %v2834
    %2909 = vmatpush.bf16.msra.mxu0 %v2833
    %2910 = vmatmul.bf16.gmra.mxu0 %v2626
    %v2911 = vpop.f32.mrf.mxu0
    %v2912 = vadd.f32 %v2899, %v2911
    %v2913 = vpop.f32.mrf.mxu0
    %2914 = vdwg.mxu0
    %2915 = vmatpush.bf16.msra.mxu0 %v2848
    %2916 = vmatpush.bf16.msra.mxu0 %v2847
    %2917 = vmatpush.bf16.msra.mxu0 %v2846
    %2918 = vmatpush.bf16.msra.mxu0 %v2845
    %2919 = vmatpush.bf16.msra.mxu0 %v2844
    %2920 = vmatpush.bf16.msra.mxu0 %v2843
    %2921 = vmatpush.bf16.msra.mxu0 %v2842
    %2922 = vmatpush.bf16.msra.mxu0 %v2841
    %2923 = vmatmul.bf16.gmra.mxu0 %v2627
    %v2924 = vpop.f32.mrf.mxu0
    %v2925 = vadd.f32 %v2912, %v2924
    %v2926 = vpop.f32.mrf.mxu0
    %2927 = vdwg.mxu0
    %2928 = vmatpush.bf16.msra.mxu0 %v2856
    %2929 = vmatpush.bf16.msra.mxu0 %v2855
    %2930 = vmatpush.bf16.msra.mxu0 %v2854
    %2931 = vmatpush.bf16.msra.mxu0 %v2853
    %2932 = vmatpush.bf16.msra.mxu0 %v2852
    %2933 = vmatpush.bf16.msra.mxu0 %v2851
    %2934 = vmatpush.bf16.msra.mxu0 %v2850
    %2935 = vmatpush.bf16.msra.mxu0 %v2849
    %2936 = vmatmul.bf16.gmra.mxu0 %v2628
    %v2937 = vpop.f32.mrf.mxu0
    %v2938 = vadd.f32 %v2925, %v2937
    %v2939 = vpop.f32.mrf.mxu0
    %2940 = vdwg.mxu0
    %v2941 = vmax.f32 %v2938, 0.0
    %v2942 = vpack.c.bf16 %v2941, %v2941
    %v2943 = vld [vmem:[#allocation13] sm:$0xf]
    %v2944 = vld [vmem:[#allocation13 + $0x4] sm:$0xf]
    %v2945 = vld [vmem:[#allocation13 + $0x8] sm:$0xf]
    %v2946 = vld [vmem:[#allocation13 + $0xc] sm:$0xf]
    %v2947 = vld [vmem:[#allocation13 + $0x10] sm:$0xf]
    %v2948 = vld [vmem:[#allocation13 + $0x14] sm:$0xf]
    %v2949 = vld [vmem:[#allocation13 + $0x18] sm:$0xf]
    %v2950 = vld [vmem:[#allocation13 + $0x1c] sm:$0xf]
    %v2951 = vld [vmem:[#allocation13 + $0x20] sm:$0xf]
    %v2952 = vld [vmem:[#allocation13 + $0x24] sm:$0xf]
    %v2953 = vld [vmem:[#allocation13 + $0x28] sm:$0xf]
    %v2954 = vld [vmem:[#allocation13 + $0x2c] sm:$0xf]
    %v2955 = vld [vmem:[#allocation13 + $0x30] sm:$0xf]
    %v2956 = vld [vmem:[#allocation13 + $0x34] sm:$0xf]
    %v2957 = vld [vmem:[#allocation13 + $0x38] sm:$0xf]
    %v2958 = vld [vmem:[#allocation13 + $0x3c] sm:$0xf]
    %v2959 = vld [vmem:[%s8] sm:$0x1]
    %v2961 = vperm.slane %v2959, 0
    %v2979 = vunpack.c.l.b16 %v2943
    %v2980 = vunpack.c.l.b16 %v2944
    %v2981 = vunpack.c.l.b16 %v2945
    %v2982 = vunpack.c.l.b16 %v2946
    %v2983 = vunpack.c.l.b16 %v2947
    %v2984 = vunpack.c.l.b16 %v2948
    %v2985 = vunpack.c.l.b16 %v2949
    %v2986 = vunpack.c.l.b16 %v2950
    %v2987 = vunpack.c.l.b16 %v2951
    %v2988 = vunpack.c.l.b16 %v2952
    %v2989 = vunpack.c.l.b16 %v2953
    %v2990 = vunpack.c.l.b16 %v2954
    %v2991 = vunpack.c.l.b16 %v2955
    %v2992 = vunpack.c.l.b16 %v2956
    %v2993 = vunpack.c.l.b16 %v2957
    %v2994 = vunpack.c.l.b16 %v2958
    %v2995 = vpack.c.b16 %v2980, %v2979
    %v2996 = vpack.c.b16 %v2982, %v2981
    %v2997 = vpack.c.b16 %v2984, %v2983
    %v2998 = vpack.c.b16 %v2986, %v2985
    %v2999 = vpack.c.b16 %v2988, %v2987
    %v3000 = vpack.c.b16 %v2990, %v2989
    %v3001 = vpack.c.b16 %v2992, %v2991
    %v3002 = vpack.c.b16 %v2994, %v2993
    %3011 = vmatpush.bf16.msra.mxu0 %v3002
    %3012 = vmatpush.bf16.msra.mxu0 %v3001
    %3013 = vmatpush.bf16.msra.mxu0 %v3000
    %3014 = vmatpush.bf16.msra.mxu0 %v2999
    %3015 = vmatpush.bf16.msra.mxu0 %v2998
    %3016 = vmatpush.bf16.msra.mxu0 %v2997
    %3017 = vmatpush.bf16.msra.mxu0 %v2996
    %3018 = vmatpush.bf16.msra.mxu0 %v2995
    %3019 = vmatmul.bf16.gmra.mxu0 %v2942
    %v3020 = vpop.f32.mrf.mxu0
    %v3021 = vadd.f32 %v2961, %v3020
    %v3022 = vpop.f32.mrf.mxu0
    %3023 = vdwg.mxu0
    %3024 = vmax.xlane.f32.xlu0 %v3021
    %v3025 = vpop.xlane.xlu0 %3024
    %v3026 = vsub.f32 %v3021, %v3025
    %v3027 = vmul.f32 %v3026, 1.442695
    %v3028 = vpow.pop %v3027
    %3029 = vadd.xlane.f32.xlu0 %v3028
    %v3030 = vpop.xlane.xlu0 %3029
    %v3031 = vrcp.pop %v3030
    %v3032 = vmul.f32 %v3030, %v3031
    %v3033 = vsub.f32 1.0, %v3032
    %v3034 = vmul.f32 %v3031, %v3033
    %v3035 = vadd.f32 %v3031, %v3034
    %vm3036 = vweird.f32 %v3030
    %vm3037 = vweird.f32 %v3031
    %vm3038 = vmor %vm3036, %vm3037
    %v3039 = vsel %vm3038, %v3031, %v3035
    %v3040 = vand.u32 2147483647, %v3030
    %vm3041 = vcmp.eq.f32.partialorder %v3040, 8.507059e+37
    %v3042 = vand.u32 %v3030, 2147483648
    %v3043 = vor.u32 1.1754944e-38, %v3042
    %v3044 = vsel %vm3041, %v3043, %v3039
    %v3045 = vmul.f32 %v3028, %v3044
    %3046 = vst [vmem:[#allocation14] sm:$0xff] %v3045
    // Predicated region
    $region66: #{tpu_custom_call.1} parent=1 // pred_check
      _
    $region67: #{tpu_custom_call.1} parent=1 // pred_check_branch
      %3048 = sbr.rel (0) target = $region69
    $region68: #{tpu_custom_call.1} parent=1 // pred_region
      %3050 = vsyncadd [#allocation4], 0
      %s3052 = sshll.u32 [#allocation14], 4
      %s3053 = int_to_ptr.vmem [resolvable:$true] %s3052
      %s3054 = sshll.u32 %s9, 4
      %s3055 = int_to_ptr.hbm [resolvable:$true] %s3054
      %3057 = dma.vmem_to_hbm [thread:$0]  %s3053, 128, %s3055, [#allocation4]
    $region69: #{tpu_custom_call.1} parent=1 // pred_fallthru
      _
    // Predicated region
    $region70: #{tpu_custom_call.1} parent=1 // pred_check
      _
    $region71: #{tpu_custom_call.1} parent=1 // pred_check_branch
      %3059 = sbr.rel (0) target = $region73
    $region72: #{tpu_custom_call.1} parent=1 // pred_region
      %3061 = dma.done [#allocation4], 128
    $region73: #{tpu_custom_call.1} parent=1 // pred_fallthru
      _
    %3062 = vsyncpa [#allocation3], 1
    %3063 = vsyncpa [#allocation6], 1
    %3064 = vsyncpa [#allocation9], 1
    %3065 = vsyncpa [#allocation12], 1
    %3066 = vsyncpa [#allocation4], 1

</llo_original>
